<compile_context>
chip_gen: v7x
topology: tpu7x:2x2x1
jax: 0.10.0
libtpu: 0.0.40
codegen_flags: <defaults>
</compile_context>

<pallas_src>
import jax
import jax.numpy as jnp
from jax import lax
from jax.experimental import pallas as pl
from jax.experimental.pallas import tpu as pltpu


def _round_up(n, m):
    return ((n + m - 1) // m) * m


def lstm_model_kernel(x_ref,      # (T, BB, D)    time-major input, one batch block
                      wih_ref,    # (D, 4H)       LSTM input->hidden weights (transposed)
                      whh_ref,    # (H, 4H)       LSTM hidden->hidden weights (transposed)
                      b_ref,      # (1, 4H)       b_ih + b_hh combined
                      w1_ref,     # (H, 16)       fc1 weight (transposed)
                      b1_ref,     # (1, 16)       fc1 bias
                      w2_ref,     # (16, OP)      fc2 weight (transposed, lane-padded)
                      b2_ref,     # (1, OP)       fc2 bias (lane-padded)
                      out_ref,    # (BB, OP)
                      xw_ref):    # (T*BB, 4H)    VMEM scratch: pre-projected inputs
    T, BB, D = x_ref.shape
    H = whh_ref.shape[0]
    G = 4 * H

    wih = wih_ref[...]
    whh = whh_ref[...]

    # ---- (1) input projection, hoisted off the serial critical path --------
    # One MXU matmul with M = T*BB (no recurrence dependency), bias fused.
    # Reshape only merges the two non-lane dims (BB is a multiple of 8), so it
    # is layout-free.
    x2d = x_ref[...].reshape(T * BB, D)
    bias = jnp.broadcast_to(b_ref[...], (T * BB, G))          # hoisted broadcast
    xw_ref[...] = jnp.dot(x2d, wih, preferred_element_type=jnp.float32) + bias

    # ---- (2) serial LSTM recurrence (only h @ W_hh on the critical path) ---
    # Lane mask selecting the tanh-activated 'g' gate lanes [2H, 3H)
    # (PyTorch gate ordering: i, f, g, o).
    lane = lax.broadcasted_iota(jnp.int32, (BB, G), 1)
    g_mask = (lane >= 2 * H) & (lane < 3 * H)

    h = jnp.zeros((BB, H), jnp.float32)
    c = jnp.zeros((BB, H), jnp.float32)

    for t in range(T):                               # static, fully unrolled
        gates = (xw_ref[t * BB:(t + 1) * BB, :]
                 + jnp.dot(h, whh, preferred_element_type=jnp.float32))
        # Single EUP pass over the full (BB, 4H) vreg:
        #   g lanes   : tanh(x)
        #   i/f/o lanes: sigmoid(x) = 0.5 * tanh(x / 2) + 0.5
        pre = jnp.where(g_mask, gates, 0.5 * gates)           # VPU
        th = jnp.tanh(pre)                                    # EUP (one pass)
        act = jnp.where(g_mask, th, 0.5 * th + 0.5)           # VPU fixup
        i_g = act[:, 0 * H:1 * H]
        f_g = act[:, 1 * H:2 * H]
        g_g = act[:, 2 * H:3 * H]
        o_g = act[:, 3 * H:4 * H]
        c = f_g * c + i_g * g_g
        h = o_g * jnp.tanh(c)

    # ---- (3) head: dropout (inference identity) -> fc1 -> ReLU -> fc2 -> sigmoid
    z1 = jnp.dot(h, w1_ref[...], preferred_element_type=jnp.float32) + b1_ref[...]
    z1 = jnp.maximum(z1, 0.0)                                 # ReLU
    z2 = jnp.dot(z1, w2_ref[...], preferred_element_type=jnp.float32) + b2_ref[...]
    out_ref[...] = jax.nn.sigmoid(z2)                         # lane-dense (BB, OP) store


def lstm_model_forward(x, params, *, batch_block=None):
    """x: (B, T, D) float32 (batch_first, like PyTorch). Returns (B, O)."""
    B, T, D = x.shape
    H = params["whh_t"].shape[0]
    G = 4 * H
    F1 = params["w1_t"].shape[1]
    O = params["w2_t"].shape[1]

    # Big batch blocks for MXU/DMA occupancy; at tiny B fall back to one
    # sublane-full block.  >=2 blocks at real batch sizes lets the "parallel"
    # grid axis shard across the two TensorCores on v7x.
    if batch_block is None:
        batch_block = min(128, _round_up(B, 8))
    batch_block = max(8, _round_up(batch_block, 8))

    # Pad batch to a multiple of the batch block and the output lanes to a
    # multiple of 128 so the kernel's final store is an unmasked full tile.
    B_pad = _round_up(B, batch_block)
    OP = _round_up(O, 128)
    if B_pad != B:
        x = jnp.pad(x, ((0, B_pad - B), (0, 0), (0, 0)))
    w2p = jnp.pad(params["w2_t"], ((0, 0), (0, OP - O)))
    b2p = jnp.pad(params["b2"], ((0, 0), (0, OP - O)))

    x_tm = jnp.transpose(x, (1, 0, 2))          # (T, B_pad, D) time-major
    nb = B_pad // batch_block

    out = pl.pallas_call(
        lstm_model_kernel,
        out_shape=jax.ShapeDtypeStruct((B_pad, OP), jnp.float32),
        grid_spec=pltpu.PrefetchScalarGridSpec(
            num_scalar_prefetch=0,
            grid=(nb,),
            in_specs=[
                pl.BlockSpec((T, batch_block, D), lambda i: (0, i, 0)),
                pl.BlockSpec((D, G), lambda i: (0, 0)),
                pl.BlockSpec((H, G), lambda i: (0, 0)),
                pl.BlockSpec((1, G), lambda i: (0, 0)),
                pl.BlockSpec((H, F1), lambda i: (0, 0)),
                pl.BlockSpec((1, F1), lambda i: (0, 0)),
                pl.BlockSpec((F1, OP), lambda i: (0, 0)),
                pl.BlockSpec((1, OP), lambda i: (0, 0)),
            ],
            out_specs=pl.BlockSpec((batch_block, OP), lambda i: (i, 0)),
            scratch_shapes=[pltpu.VMEM((T * batch_block, G), jnp.float32)],
        ),
        compiler_params=pltpu.CompilerParams(
            dimension_semantics=("parallel",),
        ),
    )(x_tm,
      params["wih_t"], params["whh_t"], params["b_lstm"],
      params["w1_t"], params["b1"], w2p, b2p)

    return out[:B, :O]


def init_params(key, input_size, hidden_size, output_size=1):
    """Deterministic init mirroring PyTorch shapes (stored transposed for the kernel)."""
    ks = jax.random.split(key, 8)
    H = hidden_size
    bound_lstm = 1.0 / jnp.sqrt(H)
    bound_fc1 = 1.0 / jnp.sqrt(H)
    bound_fc2 = 1.0 / jnp.sqrt(16)

    # nn.LSTM: weight_ih_l0 (4H, D), weight_hh_l0 (4H, H), bias_ih/bias_hh (4H,)
    w_ih = jax.random.uniform(ks[0], (4 * H, input_size), jnp.float32, -bound_lstm, bound_lstm)
    w_hh = jax.random.uniform(ks[1], (4 * H, H), jnp.float32, -bound_lstm, bound_lstm)
    b_ih = jax.random.uniform(ks[2], (4 * H,), jnp.float32, -bound_lstm, bound_lstm)
    b_hh = jax.random.uniform(ks[3], (4 * H,), jnp.float32, -bound_lstm, bound_lstm)
    # nn.Linear fc1: (16, H), bias (16,) ; fc2: (O, 16), bias (O,)
    w1 = jax.random.uniform(ks[4], (16, H), jnp.float32, -bound_fc1, bound_fc1)
    b1 = jax.random.uniform(ks[5], (16,), jnp.float32, -bound_fc1, bound_fc1)
    w2 = jax.random.uniform(ks[6], (output_size, 16), jnp.float32, -bound_fc2, bound_fc2)
    b2 = jax.random.uniform(ks[7], (output_size,), jnp.float32, -bound_fc2, bound_fc2)

    return {
        "wih_t": w_ih.T,                       # (D, 4H)
        "whh_t": w_hh.T,                       # (H, 4H)
        "b_lstm": (b_ih + b_hh)[None, :],      # (1, 4H)
        "w1_t": w1.T,                          # (H, 16)
        "b1": b1[None, :],                     # (1, 16)
        "w2_t": w2.T,                          # (16, O)
        "b2": b2[None, :],                     # (1, O)
    }


def reference_forward(x, params):
    """Pure-JAX reference (PyTorch LSTM -> fc1 -> ReLU -> fc2 -> sigmoid, eval)."""
    B, T, D = x.shape
    H = params["whh_t"].shape[0]
    wih, whh, b = params["wih_t"], params["whh_t"], params["b_lstm"][0]
    h = jnp.zeros((B, H), jnp.float32)
    c = jnp.zeros((B, H), jnp.float32)
    for t in range(T):
        gates = x[:, t, :] @ wih + h @ whh + b
        i = jax.nn.sigmoid(gates[:, 0 * H:1 * H])
        f = jax.nn.sigmoid(gates[:, 1 * H:2 * H])
        g = jnp.tanh(gates[:, 2 * H:3 * H])
        o = jax.nn.sigmoid(gates[:, 3 * H:4 * H])
        c = f * c + i * g
        h = o * jnp.tanh(c)
    z1 = jnp.maximum(h @ params["w1_t"] + params["b1"], 0.0)
    return jax.nn.sigmoid(z1 @ params["w2_t"] + params["b2"])


if __name__ == "__main__":
    # Small shapes consistent with the module: batch=2, seq=8, input=4, hidden=32, out=1
    B, T, D, H, O = 2, 8, 4, 32, 1

    key = jax.random.PRNGKey(0)
    k_x, k_p = jax.random.split(key)
    x = jax.random.normal(k_x, (B, T, D), jnp.float32)
    params = init_params(k_p, input_size=D, hidden_size=H, output_size=O)

    fwd = jax.jit(lstm_model_forward)
    out = jax.block_until_ready(fwd(x, params))

    assert out.shape == (B, O), out.shape
    assert bool(jnp.all(jnp.isfinite(out)))
    assert bool(jnp.all((out >= 0.0) & (out <= 1.0)))   # sigmoid range sanity check

    ref = reference_forward(x, params)
    assert bool(jnp.allclose(out, ref, rtol=1e-5, atol=1e-5)), (out, ref)

    print("KERNEL_OK")
</pallas_src>

<mosaic_0001>
module attributes {stable_mosaic.version = 11 : i64} {
  func.func @lstm_model_kernel(%arg0: i32, %arg1: memref<8x8x4xf32, #tpu.memory_space<vmem>>, %arg2: memref<4x128xf32, #tpu.memory_space<vmem>>, %arg3: memref<32x128xf32, #tpu.memory_space<vmem>>, %arg4: memref<1x128xf32, #tpu.memory_space<vmem>>, %arg5: memref<32x16xf32, #tpu.memory_space<vmem>>, %arg6: memref<1x16xf32, #tpu.memory_space<vmem>>, %arg7: memref<16x128xf32, #tpu.memory_space<vmem>>, %arg8: memref<1x128xf32, #tpu.memory_space<vmem>>, %arg9: memref<8x128xf32, #tpu.memory_space<vmem>>, %arg10: memref<64x128xf32, #tpu.memory_space<vmem>>) attributes {dimension_semantics = [#tpu.dimension_semantics<parallel>], iteration_bounds = array<i64: 1>, scalar_prefetch = 0 : i64, scratch_operands = 1 : i64, tpu.core_type = #tpu.core_type<tc>, window_params = [{transform_indices = @transform_0, window_bounds = array<i64: 8, 8, 4>}, {pipeline_mode = #tpu.pipeline_mode<synchronous>, transform_indices = @transform_1, window_bounds = array<i64: 4, 128>}, {pipeline_mode = #tpu.pipeline_mode<synchronous>, transform_indices = @transform_2, window_bounds = array<i64: 32, 128>}, {pipeline_mode = #tpu.pipeline_mode<synchronous>, transform_indices = @transform_3, window_bounds = array<i64: 1, 128>}, {pipeline_mode = #tpu.pipeline_mode<synchronous>, transform_indices = @transform_4, window_bounds = array<i64: 32, 16>}, {pipeline_mode = #tpu.pipeline_mode<synchronous>, transform_indices = @transform_5, window_bounds = array<i64: 1, 16>}, {pipeline_mode = #tpu.pipeline_mode<synchronous>, transform_indices = @transform_6, window_bounds = array<i64: 16, 128>}, {pipeline_mode = #tpu.pipeline_mode<synchronous>, transform_indices = @transform_7, window_bounds = array<i64: 1, 128>}, {transform_indices = @transform_8, window_bounds = array<i64: 8, 128>}]} {
    %c0 = arith.constant 0 : index
    %c0_0 = arith.constant 0 : index
    %0 = vector.load %arg2[%c0, %c0_0] : memref<4x128xf32, #tpu.memory_space<vmem>>, vector<4x128xf32>
    %c0_1 = arith.constant 0 : index
    %c0_2 = arith.constant 0 : index
    %1 = vector.load %arg3[%c0_1, %c0_2] : memref<32x128xf32, #tpu.memory_space<vmem>>, vector<32x128xf32>
    %c0_3 = arith.constant 0 : index
    %c0_4 = arith.constant 0 : index
    %c0_5 = arith.constant 0 : index
    %2 = vector.load %arg1[%c0_3, %c0_4, %c0_5] : memref<8x8x4xf32, #tpu.memory_space<vmem>>, vector<8x8x4xf32>
    %3 = vector.shape_cast %2 : vector<8x8x4xf32> to vector<64x4xf32>
    %c0_6 = arith.constant 0 : index
    %c0_7 = arith.constant 0 : index
    %4 = vector.load %arg4[%c0_6, %c0_7] : memref<1x128xf32, #tpu.memory_space<vmem>>, vector<1x128xf32>
    %5 = vector.shape_cast %4 : vector<1x128xf32> to vector<1x128xf32>
    %6 = vector.broadcast %5 : vector<1x128xf32> to vector<64x128xf32>
    %cst = arith.constant dense<0.000000e+00> : vector<64x128xf32>
    %7 = tpu.matmul %3, %0, %cst {dimension_numbers = #tpu.dot_dimension_numbers<[1], [0], [0], [1], [0, 0, 1, 1], [], []>} : vector<64x4xf32>, vector<4x128xf32>, vector<64x128xf32> -> vector<64x128xf32>
    %8 = arith.addf %7, %6 : vector<64x128xf32>
    %c0_8 = arith.constant 0 : index
    %c0_9 = arith.constant 0 : index
    %9 = vector.load %arg10[%c0_8, %c0_9] : memref<64x128xf32, #tpu.memory_space<vmem>>, vector<64x128xf32>
    tpu.vector_store %arg10[%c0_8, %c0_9], %8 {strides = array<i32>} : memref<64x128xf32, #tpu.memory_space<vmem>>, vector<64x128xf32>,
    %10 = tpu.iota {dimensions = array<i32: 1>} : vector<8x128xi32>
    %c64_i32 = arith.constant 64 : i32
    %11 = vector.broadcast %c64_i32 : i32 to vector<8x128xi32>
    %12 = arith.cmpi sge, %10, %11 : vector<8x128xi32>
    %c96_i32 = arith.constant 96 : i32
    %13 = vector.broadcast %c96_i32 : i32 to vector<8x128xi32>
    %14 = arith.cmpi slt, %10, %13 : vector<8x128xi32>
    %15 = arith.andi %12, %14 : vector<8x128xi1>
    %cst_10 = arith.constant 0.000000e+00 : f32
    %16 = vector.broadcast %cst_10 : f32 to vector<8x32xf32>
    %cst_11 = arith.constant 0.000000e+00 : f32
    %17 = vector.broadcast %cst_11 : f32 to vector<8x32xf32>
    %c0_12 = arith.constant 0 : index
    %c0_13 = arith.constant 0 : index
    %18 = vector.load %arg10[%c0_12, %c0_13] : memref<64x128xf32, #tpu.memory_space<vmem>>, vector<8x128xf32>
    %cst_14 = arith.constant dense<0.000000e+00> : vector<8x128xf32>
    %19 = tpu.matmul %16, %1, %cst_14 {dimension_numbers = #tpu.dot_dimension_numbers<[1], [0], [0], [1], [0, 0, 1, 1], [], []>} : vector<8x32xf32>, vector<32x128xf32>, vector<8x128xf32> -> vector<8x128xf32>
    %20 = arith.addf %18, %19 : vector<8x128xf32>
    %cst_15 = arith.constant 5.000000e-01 : f32
    %21 = vector.broadcast %cst_15 : f32 to vector<8x128xf32>
    %22 = arith.mulf %21, %20 : vector<8x128xf32>
    %23 = arith.select %15, %20, %22 : vector<8x128xi1>, vector<8x128xf32>
    %24 = math.tanh %23 : vector<8x128xf32>
    %cst_16 = arith.constant 5.000000e-01 : f32
    %25 = vector.broadcast %cst_16 : f32 to vector<8x128xf32>
    %26 = arith.mulf %25, %24 : vector<8x128xf32>
    %cst_17 = arith.constant 5.000000e-01 : f32
    %27 = vector.broadcast %cst_17 : f32 to vector<8x128xf32>
    %28 = arith.addf %26, %27 : vector<8x128xf32>
    %29 = arith.select %15, %24, %28 : vector<8x128xi1>, vector<8x128xf32>
    %30 = vector.extract_strided_slice %29 {offsets = [0, 0], sizes = [8, 32], strides = [1, 1]} : vector<8x128xf32> to vector<8x32xf32>
    %31 = vector.extract_strided_slice %29 {offsets = [0, 32], sizes = [8, 32], strides = [1, 1]} : vector<8x128xf32> to vector<8x32xf32>
    %32 = vector.extract_strided_slice %29 {offsets = [0, 64], sizes = [8, 32], strides = [1, 1]} : vector<8x128xf32> to vector<8x32xf32>
    %33 = vector.extract_strided_slice %29 {offsets = [0, 96], sizes = [8, 32], strides = [1, 1]} : vector<8x128xf32> to vector<8x32xf32>
    %34 = arith.mulf %31, %17 : vector<8x32xf32>
    %35 = arith.mulf %30, %32 : vector<8x32xf32>
    %36 = arith.addf %34, %35 : vector<8x32xf32>
    %37 = math.tanh %36 : vector<8x32xf32>
    %38 = arith.mulf %33, %37 : vector<8x32xf32>
    %c8 = arith.constant 8 : index
    %c0_18 = arith.constant 0 : index
    %39 = vector.load %arg10[%c8, %c0_18] : memref<64x128xf32, #tpu.memory_space<vmem>>, vector<8x128xf32>
    %cst_19 = arith.constant dense<0.000000e+00> : vector<8x128xf32>
    %40 = tpu.matmul %38, %1, %cst_19 {dimension_numbers = #tpu.dot_dimension_numbers<[1], [0], [0], [1], [0, 0, 1, 1], [], []>} : vector<8x32xf32>, vector<32x128xf32>, vector<8x128xf32> -> vector<8x128xf32>
    %41 = arith.addf %39, %40 : vector<8x128xf32>
    %cst_20 = arith.constant 5.000000e-01 : f32
    %42 = vector.broadcast %cst_20 : f32 to vector<8x128xf32>
    %43 = arith.mulf %42, %41 : vector<8x128xf32>
    %44 = arith.select %15, %41, %43 : vector<8x128xi1>, vector<8x128xf32>
    %45 = math.tanh %44 : vector<8x128xf32>
    %cst_21 = arith.constant 5.000000e-01 : f32
    %46 = vector.broadcast %cst_21 : f32 to vector<8x128xf32>
    %47 = arith.mulf %46, %45 : vector<8x128xf32>
    %cst_22 = arith.constant 5.000000e-01 : f32
    %48 = vector.broadcast %cst_22 : f32 to vector<8x128xf32>
    %49 = arith.addf %47, %48 : vector<8x128xf32>
    %50 = arith.select %15, %45, %49 : vector<8x128xi1>, vector<8x128xf32>
    %51 = vector.extract_strided_slice %50 {offsets = [0, 0], sizes = [8, 32], strides = [1, 1]} : vector<8x128xf32> to vector<8x32xf32>
    %52 = vector.extract_strided_slice %50 {offsets = [0, 32], sizes = [8, 32], strides = [1, 1]} : vector<8x128xf32> to vector<8x32xf32>
    %53 = vector.extract_strided_slice %50 {offsets = [0, 64], sizes = [8, 32], strides = [1, 1]} : vector<8x128xf32> to vector<8x32xf32>
    %54 = vector.extract_strided_slice %50 {offsets = [0, 96], sizes = [8, 32], strides = [1, 1]} : vector<8x128xf32> to vector<8x32xf32>
    %55 = arith.mulf %52, %36 : vector<8x32xf32>
    %56 = arith.mulf %51, %53 : vector<8x32xf32>
    %57 = arith.addf %55, %56 : vector<8x32xf32>
    %58 = math.tanh %57 : vector<8x32xf32>
    %59 = arith.mulf %54, %58 : vector<8x32xf32>
    %c16 = arith.constant 16 : index
    %c0_23 = arith.constant 0 : index
    %60 = vector.load %arg10[%c16, %c0_23] : memref<64x128xf32, #tpu.memory_space<vmem>>, vector<8x128xf32>
    %cst_24 = arith.constant dense<0.000000e+00> : vector<8x128xf32>
    %61 = tpu.matmul %59, %1, %cst_24 {dimension_numbers = #tpu.dot_dimension_numbers<[1], [0], [0], [1], [0, 0, 1, 1], [], []>} : vector<8x32xf32>, vector<32x128xf32>, vector<8x128xf32> -> vector<8x128xf32>
    %62 = arith.addf %60, %61 : vector<8x128xf32>
    %cst_25 = arith.constant 5.000000e-01 : f32
    %63 = vector.broadcast %cst_25 : f32 to vector<8x128xf32>
    %64 = arith.mulf %63, %62 : vector<8x128xf32>
    %65 = arith.select %15, %62, %64 : vector<8x128xi1>, vector<8x128xf32>
    %66 = math.tanh %65 : vector<8x128xf32>
    %cst_26 = arith.constant 5.000000e-01 : f32
    %67 = vector.broadcast %cst_26 : f32 to vector<8x128xf32>
    %68 = arith.mulf %67, %66 : vector<8x128xf32>
    %cst_27 = arith.constant 5.000000e-01 : f32
    %69 = vector.broadcast %cst_27 : f32 to vector<8x128xf32>
    %70 = arith.addf %68, %69 : vector<8x128xf32>
    %71 = arith.select %15, %66, %70 : vector<8x128xi1>, vector<8x128xf32>
    %72 = vector.extract_strided_slice %71 {offsets = [0, 0], sizes = [8, 32], strides = [1, 1]} : vector<8x128xf32> to vector<8x32xf32>
    %73 = vector.extract_strided_slice %71 {offsets = [0, 32], sizes = [8, 32], strides = [1, 1]} : vector<8x128xf32> to vector<8x32xf32>
    %74 = vector.extract_strided_slice %71 {offsets = [0, 64], sizes = [8, 32], strides = [1, 1]} : vector<8x128xf32> to vector<8x32xf32>
    %75 = vector.extract_strided_slice %71 {offsets = [0, 96], sizes = [8, 32], strides = [1, 1]} : vector<8x128xf32> to vector<8x32xf32>
    %76 = arith.mulf %73, %57 : vector<8x32xf32>
    %77 = arith.mulf %72, %74 : vector<8x32xf32>
    %78 = arith.addf %76, %77 : vector<8x32xf32>
    %79 = math.tanh %78 : vector<8x32xf32>
    %80 = arith.mulf %75, %79 : vector<8x32xf32>
    %c24 = arith.constant 24 : index
    %c0_28 = arith.constant 0 : index
    %81 = vector.load %arg10[%c24, %c0_28] : memref<64x128xf32, #tpu.memory_space<vmem>>, vector<8x128xf32>
    %cst_29 = arith.constant dense<0.000000e+00> : vector<8x128xf32>
    %82 = tpu.matmul %80, %1, %cst_29 {dimension_numbers = #tpu.dot_dimension_numbers<[1], [0], [0], [1], [0, 0, 1, 1], [], []>} : vector<8x32xf32>, vector<32x128xf32>, vector<8x128xf32> -> vector<8x128xf32>
    %83 = arith.addf %81, %82 : vector<8x128xf32>
    %cst_30 = arith.constant 5.000000e-01 : f32
    %84 = vector.broadcast %cst_30 : f32 to vector<8x128xf32>
    %85 = arith.mulf %84, %83 : vector<8x128xf32>
    %86 = arith.select %15, %83, %85 : vector<8x128xi1>, vector<8x128xf32>
    %87 = math.tanh %86 : vector<8x128xf32>
    %cst_31 = arith.constant 5.000000e-01 : f32
    %88 = vector.broadcast %cst_31 : f32 to vector<8x128xf32>
    %89 = arith.mulf %88, %87 : vector<8x128xf32>
    %cst_32 = arith.constant 5.000000e-01 : f32
    %90 = vector.broadcast %cst_32 : f32 to vector<8x128xf32>
    %91 = arith.addf %89, %90 : vector<8x128xf32>
    %92 = arith.select %15, %87, %91 : vector<8x128xi1>, vector<8x128xf32>
    %93 = vector.extract_strided_slice %92 {offsets = [0, 0], sizes = [8, 32], strides = [1, 1]} : vector<8x128xf32> to vector<8x32xf32>
    %94 = vector.extract_strided_slice %92 {offsets = [0, 32], sizes = [8, 32], strides = [1, 1]} : vector<8x128xf32> to vector<8x32xf32>
    %95 = vector.extract_strided_slice %92 {offsets = [0, 64], sizes = [8, 32], strides = [1, 1]} : vector<8x128xf32> to vector<8x32xf32>
    %96 = vector.extract_strided_slice %92 {offsets = [0, 96], sizes = [8, 32], strides = [1, 1]} : vector<8x128xf32> to vector<8x32xf32>
    %97 = arith.mulf %94, %78 : vector<8x32xf32>
    %98 = arith.mulf %93, %95 : vector<8x32xf32>
    %99 = arith.addf %97, %98 : vector<8x32xf32>
    %100 = math.tanh %99 : vector<8x32xf32>
    %101 = arith.mulf %96, %100 : vector<8x32xf32>
    %c32 = arith.constant 32 : index
    %c0_33 = arith.constant 0 : index
    %102 = vector.load %arg10[%c32, %c0_33] : memref<64x128xf32, #tpu.memory_space<vmem>>, vector<8x128xf32>
    %cst_34 = arith.constant dense<0.000000e+00> : vector<8x128xf32>
    %103 = tpu.matmul %101, %1, %cst_34 {dimension_numbers = #tpu.dot_dimension_numbers<[1], [0], [0], [1], [0, 0, 1, 1], [], []>} : vector<8x32xf32>, vector<32x128xf32>, vector<8x128xf32> -> vector<8x128xf32>
    %104 = arith.addf %102, %103 : vector<8x128xf32>
    %cst_35 = arith.constant 5.000000e-01 : f32
    %105 = vector.broadcast %cst_35 : f32 to vector<8x128xf32>
    %106 = arith.mulf %105, %104 : vector<8x128xf32>
    %107 = arith.select %15, %104, %106 : vector<8x128xi1>, vector<8x128xf32>
    %108 = math.tanh %107 : vector<8x128xf32>
    %cst_36 = arith.constant 5.000000e-01 : f32
    %109 = vector.broadcast %cst_36 : f32 to vector<8x128xf32>
    %110 = arith.mulf %109, %108 : vector<8x128xf32>
    %cst_37 = arith.constant 5.000000e-01 : f32
    %111 = vector.broadcast %cst_37 : f32 to vector<8x128xf32>
    %112 = arith.addf %110, %111 : vector<8x128xf32>
    %113 = arith.select %15, %108, %112 : vector<8x128xi1>, vector<8x128xf32>
    %114 = vector.extract_strided_slice %113 {offsets = [0, 0], sizes = [8, 32], strides = [1, 1]} : vector<8x128xf32> to vector<8x32xf32>
    %115 = vector.extract_strided_slice %113 {offsets = [0, 32], sizes = [8, 32], strides = [1, 1]} : vector<8x128xf32> to vector<8x32xf32>
    %116 = vector.extract_strided_slice %113 {offsets = [0, 64], sizes = [8, 32], strides = [1, 1]} : vector<8x128xf32> to vector<8x32xf32>
    %117 = vector.extract_strided_slice %113 {offsets = [0, 96], sizes = [8, 32], strides = [1, 1]} : vector<8x128xf32> to vector<8x32xf32>
    %118 = arith.mulf %115, %99 : vector<8x32xf32>
    %119 = arith.mulf %114, %116 : vector<8x32xf32>
    %120 = arith.addf %118, %119 : vector<8x32xf32>
    %121 = math.tanh %120 : vector<8x32xf32>
    %122 = arith.mulf %117, %121 : vector<8x32xf32>
    %c40 = arith.constant 40 : index
    %c0_38 = arith.constant 0 : index
    %123 = vector.load %arg10[%c40, %c0_38] : memref<64x128xf32, #tpu.memory_space<vmem>>, vector<8x128xf32>
    %cst_39 = arith.constant dense<0.000000e+00> : vector<8x128xf32>
    %124 = tpu.matmul %122, %1, %cst_39 {dimension_numbers = #tpu.dot_dimension_numbers<[1], [0], [0], [1], [0, 0, 1, 1], [], []>} : vector<8x32xf32>, vector<32x128xf32>, vector<8x128xf32> -> vector<8x128xf32>
    %125 = arith.addf %123, %124 : vector<8x128xf32>
    %cst_40 = arith.constant 5.000000e-01 : f32
    %126 = vector.broadcast %cst_40 : f32 to vector<8x128xf32>
    %127 = arith.mulf %126, %125 : vector<8x128xf32>
    %128 = arith.select %15, %125, %127 : vector<8x128xi1>, vector<8x128xf32>
    %129 = math.tanh %128 : vector<8x128xf32>
    %cst_41 = arith.constant 5.000000e-01 : f32
    %130 = vector.broadcast %cst_41 : f32 to vector<8x128xf32>
    %131 = arith.mulf %130, %129 : vector<8x128xf32>
    %cst_42 = arith.constant 5.000000e-01 : f32
    %132 = vector.broadcast %cst_42 : f32 to vector<8x128xf32>
    %133 = arith.addf %131, %132 : vector<8x128xf32>
    %134 = arith.select %15, %129, %133 : vector<8x128xi1>, vector<8x128xf32>
    %135 = vector.extract_strided_slice %134 {offsets = [0, 0], sizes = [8, 32], strides = [1, 1]} : vector<8x128xf32> to vector<8x32xf32>
    %136 = vector.extract_strided_slice %134 {offsets = [0, 32], sizes = [8, 32], strides = [1, 1]} : vector<8x128xf32> to vector<8x32xf32>
    %137 = vector.extract_strided_slice %134 {offsets = [0, 64], sizes = [8, 32], strides = [1, 1]} : vector<8x128xf32> to vector<8x32xf32>
    %138 = vector.extract_strided_slice %134 {offsets = [0, 96], sizes = [8, 32], strides = [1, 1]} : vector<8x128xf32> to vector<8x32xf32>
    %139 = arith.mulf %136, %120 : vector<8x32xf32>
    %140 = arith.mulf %135, %137 : vector<8x32xf32>
    %141 = arith.addf %139, %140 : vector<8x32xf32>
    %142 = math.tanh %141 : vector<8x32xf32>
    %143 = arith.mulf %138, %142 : vector<8x32xf32>
    %c48 = arith.constant 48 : index
    %c0_43 = arith.constant 0 : index
    %144 = vector.load %arg10[%c48, %c0_43] : memref<64x128xf32, #tpu.memory_space<vmem>>, vector<8x128xf32>
    %cst_44 = arith.constant dense<0.000000e+00> : vector<8x128xf32>
    %145 = tpu.matmul %143, %1, %cst_44 {dimension_numbers = #tpu.dot_dimension_numbers<[1], [0], [0], [1], [0, 0, 1, 1], [], []>} : vector<8x32xf32>, vector<32x128xf32>, vector<8x128xf32> -> vector<8x128xf32>
    %146 = arith.addf %144, %145 : vector<8x128xf32>
    %cst_45 = arith.constant 5.000000e-01 : f32
    %147 = vector.broadcast %cst_45 : f32 to vector<8x128xf32>
    %148 = arith.mulf %147, %146 : vector<8x128xf32>
    %149 = arith.select %15, %146, %148 : vector<8x128xi1>, vector<8x128xf32>
    %150 = math.tanh %149 : vector<8x128xf32>
    %cst_46 = arith.constant 5.000000e-01 : f32
    %151 = vector.broadcast %cst_46 : f32 to vector<8x128xf32>
    %152 = arith.mulf %151, %150 : vector<8x128xf32>
    %cst_47 = arith.constant 5.000000e-01 : f32
    %153 = vector.broadcast %cst_47 : f32 to vector<8x128xf32>
    %154 = arith.addf %152, %153 : vector<8x128xf32>
    %155 = arith.select %15, %150, %154 : vector<8x128xi1>, vector<8x128xf32>
    %156 = vector.extract_strided_slice %155 {offsets = [0, 0], sizes = [8, 32], strides = [1, 1]} : vector<8x128xf32> to vector<8x32xf32>
    %157 = vector.extract_strided_slice %155 {offsets = [0, 32], sizes = [8, 32], strides = [1, 1]} : vector<8x128xf32> to vector<8x32xf32>
    %158 = vector.extract_strided_slice %155 {offsets = [0, 64], sizes = [8, 32], strides = [1, 1]} : vector<8x128xf32> to vector<8x32xf32>
    %159 = vector.extract_strided_slice %155 {offsets = [0, 96], sizes = [8, 32], strides = [1, 1]} : vector<8x128xf32> to vector<8x32xf32>
    %160 = arith.mulf %157, %141 : vector<8x32xf32>
    %161 = arith.mulf %156, %158 : vector<8x32xf32>
    %162 = arith.addf %160, %161 : vector<8x32xf32>
    %163 = math.tanh %162 : vector<8x32xf32>
    %164 = arith.mulf %159, %163 : vector<8x32xf32>
    %c56 = arith.constant 56 : index
    %c0_48 = arith.constant 0 : index
    %165 = vector.load %arg10[%c56, %c0_48] : memref<64x128xf32, #tpu.memory_space<vmem>>, vector<8x128xf32>
    %cst_49 = arith.constant dense<0.000000e+00> : vector<8x128xf32>
    %166 = tpu.matmul %164, %1, %cst_49 {dimension_numbers = #tpu.dot_dimension_numbers<[1], [0], [0], [1], [0, 0, 1, 1], [], []>} : vector<8x32xf32>, vector<32x128xf32>, vector<8x128xf32> -> vector<8x128xf32>
    %167 = arith.addf %165, %166 : vector<8x128xf32>
    %cst_50 = arith.constant 5.000000e-01 : f32
    %168 = vector.broadcast %cst_50 : f32 to vector<8x128xf32>
    %169 = arith.mulf %168, %167 : vector<8x128xf32>
    %170 = arith.select %15, %167, %169 : vector<8x128xi1>, vector<8x128xf32>
    %171 = math.tanh %170 : vector<8x128xf32>
    %cst_51 = arith.constant 5.000000e-01 : f32
    %172 = vector.broadcast %cst_51 : f32 to vector<8x128xf32>
    %173 = arith.mulf %172, %171 : vector<8x128xf32>
    %cst_52 = arith.constant 5.000000e-01 : f32
    %174 = vector.broadcast %cst_52 : f32 to vector<8x128xf32>
    %175 = arith.addf %173, %174 : vector<8x128xf32>
    %176 = arith.select %15, %171, %175 : vector<8x128xi1>, vector<8x128xf32>
    %177 = vector.extract_strided_slice %176 {offsets = [0, 0], sizes = [8, 32], strides = [1, 1]} : vector<8x128xf32> to vector<8x32xf32>
    %178 = vector.extract_strided_slice %176 {offsets = [0, 32], sizes = [8, 32], strides = [1, 1]} : vector<8x128xf32> to vector<8x32xf32>
    %179 = vector.extract_strided_slice %176 {offsets = [0, 64], sizes = [8, 32], strides = [1, 1]} : vector<8x128xf32> to vector<8x32xf32>
    %180 = vector.extract_strided_slice %176 {offsets = [0, 96], sizes = [8, 32], strides = [1, 1]} : vector<8x128xf32> to vector<8x32xf32>
    %181 = arith.mulf %178, %162 : vector<8x32xf32>
    %182 = arith.mulf %177, %179 : vector<8x32xf32>
    %183 = arith.addf %181, %182 : vector<8x32xf32>
    %184 = math.tanh %183 : vector<8x32xf32>
    %185 = arith.mulf %180, %184 : vector<8x32xf32>
    %c0_53 = arith.constant 0 : index
    %c0_54 = arith.constant 0 : index
    %186 = vector.load %arg5[%c0_53, %c0_54] : memref<32x16xf32, #tpu.memory_space<vmem>>, vector<32x16xf32>
    %cst_55 = arith.constant dense<0.000000e+00> : vector<8x16xf32>
    %187 = tpu.matmul %185, %186, %cst_55 {dimension_numbers = #tpu.dot_dimension_numbers<[1], [0], [0], [1], [0, 0, 1, 1], [], []>} : vector<8x32xf32>, vector<32x16xf32>, vector<8x16xf32> -> vector<8x16xf32>
    %c0_56 = arith.constant 0 : index
    %c0_57 = arith.constant 0 : index
    %188 = vector.load %arg6[%c0_56, %c0_57] : memref<1x16xf32, #tpu.memory_space<vmem>>, vector<1x16xf32>
    %189 = vector.broadcast %188 : vector<1x16xf32> to vector<8x16xf32>
    %190 = arith.addf %187, %189 : vector<8x16xf32>
    %cst_58 = arith.constant 0.000000e+00 : f32
    %191 = vector.broadcast %cst_58 : f32 to vector<8x16xf32>
    %192 = arith.maximumf %190, %191 : vector<8x16xf32>
    %c0_59 = arith.constant 0 : index
    %c0_60 = arith.constant 0 : index
    %193 = vector.load %arg7[%c0_59, %c0_60] : memref<16x128xf32, #tpu.memory_space<vmem>>, vector<16x128xf32>
    %cst_61 = arith.constant dense<0.000000e+00> : vector<8x128xf32>
    %194 = tpu.matmul %192, %193, %cst_61 {dimension_numbers = #tpu.dot_dimension_numbers<[1], [0], [0], [1], [0, 0, 1, 1], [], []>} : vector<8x16xf32>, vector<16x128xf32>, vector<8x128xf32> -> vector<8x128xf32>
    %c0_62 = arith.constant 0 : index
    %c0_63 = arith.constant 0 : index
    %195 = vector.load %arg8[%c0_62, %c0_63] : memref<1x128xf32, #tpu.memory_space<vmem>>, vector<1x128xf32>
    %196 = vector.broadcast %195 : vector<1x128xf32> to vector<8x128xf32>
    %197 = arith.addf %194, %196 : vector<8x128xf32>
    %198 = arith.negf %197 : vector<8x128xf32>
    %199 = math.exp %198 : vector<8x128xf32>
    %cst_64 = arith.constant 1.000000e+00 : f32
    %200 = vector.broadcast %cst_64 : f32 to vector<8x128xf32>
    %201 = arith.addf %200, %199 : vector<8x128xf32>
    %202 = arith.divf %200, %201 : vector<8x128xf32>
    %c0_65 = arith.constant 0 : index
    %c0_66 = arith.constant 0 : index
    %203 = vector.load %arg9[%c0_65, %c0_66] : memref<8x128xf32, #tpu.memory_space<vmem>>, vector<8x128xf32>
    tpu.vector_store %arg9[%c0_65, %c0_66], %202 {strides = array<i32>} : memref<8x128xf32, #tpu.memory_space<vmem>>, vector<8x128xf32>,
    return
  }
  func.func @transform_0(%arg0: i32) -> (i32, i32, i32) {
    %c0_i32 = arith.constant 0 : i32
    %c0_i32_0 = arith.constant 0 : i32
    %c0_i32_1 = arith.constant 0 : i32
    return %c0_i32, %arg0, %c0_i32_0 : i32, i32, i32
  }
  func.func @transform_1(%arg0: i32) -> (i32, i32) {
    %c0_i32 = arith.constant 0 : i32
    %c0_i32_0 = arith.constant 0 : i32
    %c0_i32_1 = arith.constant 0 : i32
    return %c0_i32, %c0_i32_0 : i32, i32
  }
  func.func @transform_2(%arg0: i32) -> (i32, i32) {
    %c0_i32 = arith.constant 0 : i32
    %c0_i32_0 = arith.constant 0 : i32
    %c0_i32_1 = arith.constant 0 : i32
    return %c0_i32, %c0_i32_0 : i32, i32
  }
  func.func @transform_3(%arg0: i32) -> (i32, i32) {
    %c0_i32 = arith.constant 0 : i32
    %c0_i32_0 = arith.constant 0 : i32
    %c0_i32_1 = arith.constant 0 : i32
    return %c0_i32, %c0_i32_0 : i32, i32
  }
  func.func @transform_4(%arg0: i32) -> (i32, i32) {
    %c0_i32 = arith.constant 0 : i32
    %c0_i32_0 = arith.constant 0 : i32
    %c0_i32_1 = arith.constant 0 : i32
    return %c0_i32, %c0_i32_0 : i32, i32
  }
  func.func @transform_5(%arg0: i32) -> (i32, i32) {
    %c0_i32 = arith.constant 0 : i32
    %c0_i32_0 = arith.constant 0 : i32
    %c0_i32_1 = arith.constant 0 : i32
    return %c0_i32, %c0_i32_0 : i32, i32
  }
  func.func @transform_6(%arg0: i32) -> (i32, i32) {
    %c0_i32 = arith.constant 0 : i32
    %c0_i32_0 = arith.constant 0 : i32
    %c0_i32_1 = arith.constant 0 : i32
    return %c0_i32, %c0_i32_0 : i32, i32
  }
  func.func @transform_7(%arg0: i32) -> (i32, i32) {
    %c0_i32 = arith.constant 0 : i32
    %c0_i32_0 = arith.constant 0 : i32
    %c0_i32_1 = arith.constant 0 : i32
    return %c0_i32, %c0_i32_0 : i32, i32
  }
  func.func @transform_8(%arg0: i32) -> (i32, i32) {
    %c0_i32 = arith.constant 0 : i32
    %c0_i32_0 = arith.constant 0 : i32
    return %arg0, %c0_i32 : i32, i32
  }
}

</mosaic_0001>

<llo_original>
// kernel: lstm_model_forward.1
$region0: #{lstm_model_forward.1}
  #allocation0 [shape = 'u32[]', space=smem, size = 0x4, offset = 0x4, fixed_abs, tag = 'smem constant byte address 0x4 - core index']
  #allocation1 [shape = 'u32[144,128]{1,0:T(1,128)}', space=vmem, size = 0x12000, scoped, tag = 'internal scratch']
  #allocation2 [shape = 'f32[64,128]{1,0:T(8,128)}', space=vmem, size = 0x8000, scoped, tag = 'scratch operand']
  %s0 = inlined_call_operand.vmem [shape: f32[8,8,4], index: 0, kind: input, shape index: {}]
  %s1 = inlined_call_operand.vmem [shape: f32[4,128], index: 1, kind: input, shape index: {}]
  %s2 = inlined_call_operand.vmem [shape: f32[32,128], index: 2, kind: input, shape index: {}]
  %s3 = inlined_call_operand.vmem [shape: f32[1,128], index: 3, kind: input, shape index: {}]
  %s4 = inlined_call_operand.vmem [shape: f32[32,16], index: 4, kind: input, shape index: {}]
  %s5 = inlined_call_operand.vmem [shape: f32[1,16], index: 5, kind: input, shape index: {}]
  %s6 = inlined_call_operand.vmem [shape: f32[16,128], index: 6, kind: input, shape index: {}]
  %s7 = inlined_call_operand.vmem [shape: f32[1,128], index: 7, kind: input, shape index: {}]
  %s8 = inlined_call_operand.vmem [shape: f32[8,128], index: 8, kind: output, shape index: {}]
  %s9 = sld [smem:[#allocation0]]
  $region42: #{lstm_model_forward.1} parent=0
    _
  %s11 = ssub.s32 1, %s9
  %s12 = scalar_select 0, %s11, %s9
  // Predicated region
  $region2: #{lstm_model_forward.1} parent=0 // pred_check
    _
  $region3: #{lstm_model_forward.1} parent=0 // pred_check_branch
    %14 = sbr.rel (0) target = $region5
  $region4: #{lstm_model_forward.1} parent=0 // pred_region
    _
  $region5: #{lstm_model_forward.1} parent=0 // pred_fallthru
    _
  // Predicated region
  $region6: #{lstm_model_forward.1} parent=0 // pred_check
    _
  $region7: #{lstm_model_forward.1} parent=0 // pred_check_branch
    %16 = sbr.rel (0) target = $region9
  $region8: #{lstm_model_forward.1} parent=0 // pred_region
    _
  $region9: #{lstm_model_forward.1} parent=0 // pred_fallthru
    _
  // Predicated region
  $region10: #{lstm_model_forward.1} parent=0 // pred_check
    _
  $region11: #{lstm_model_forward.1} parent=0 // pred_check_branch
    %18 = sbr.rel (0) target = $region13
  $region12: #{lstm_model_forward.1} parent=0 // pred_region
    _
  $region13: #{lstm_model_forward.1} parent=0 // pred_fallthru
    _
  // Predicated region
  $region14: #{lstm_model_forward.1} parent=0 // pred_check
    _
  $region15: #{lstm_model_forward.1} parent=0 // pred_check_branch
    %20 = sbr.rel (0) target = $region17
  $region16: #{lstm_model_forward.1} parent=0 // pred_region
    _
  $region17: #{lstm_model_forward.1} parent=0 // pred_fallthru
    _
  // Predicated region
  $region18: #{lstm_model_forward.1} parent=0 // pred_check
    _
  $region19: #{lstm_model_forward.1} parent=0 // pred_check_branch
    %22 = sbr.rel (0) target = $region21
  $region20: #{lstm_model_forward.1} parent=0 // pred_region
    _
  $region21: #{lstm_model_forward.1} parent=0 // pred_fallthru
    _
  // Predicated region
  $region22: #{lstm_model_forward.1} parent=0 // pred_check
    _
  $region23: #{lstm_model_forward.1} parent=0 // pred_check_branch
    %24 = sbr.rel (0) target = $region25
  $region24: #{lstm_model_forward.1} parent=0 // pred_region
    _
  $region25: #{lstm_model_forward.1} parent=0 // pred_fallthru
    _
  // Predicated region
  $region26: #{lstm_model_forward.1} parent=0 // pred_check
    _
  $region27: #{lstm_model_forward.1} parent=0 // pred_check_branch
    %26 = sbr.rel (0) target = $region29
  $region28: #{lstm_model_forward.1} parent=0 // pred_region
    _
  $region29: #{lstm_model_forward.1} parent=0 // pred_fallthru
    _
  // Predicated region
  $region30: #{lstm_model_forward.1} parent=0 // pred_check
    _
  $region31: #{lstm_model_forward.1} parent=0 // pred_check_branch
    %28 = sbr.rel (0) target = $region33
  $region32: #{lstm_model_forward.1} parent=0 // pred_region
    _
  $region33: #{lstm_model_forward.1} parent=0 // pred_fallthru
    _
  %v29 = vld [vmem:[%s1] sm:$0xf]
  %v30 = vld [vmem:[%s2] sm:$0xff]
  %v31 = vld [vmem:[%s2 + $0x8] sm:$0xff]
  %v32 = vld [vmem:[%s2 + $0x10] sm:$0xff]
  %v33 = vld [vmem:[%s2 + $0x18] sm:$0xff]
  %v34 = vld [vmem:[%s0] sm:$0xff]
  %v35 = vld [vmem:[%s0 + $0x8] sm:$0xff]
  %v36 = vld [vmem:[%s0 + $0x10] sm:$0xff]
  %v37 = vld [vmem:[%s0 + $0x18] sm:$0xff]
  %v38 = vld [vmem:[%s0 + $0x20] sm:$0xff]
  %v39 = vld [vmem:[%s0 + $0x28] sm:$0xff]
  %v40 = vld [vmem:[%s0 + $0x30] sm:$0xff]
  %v41 = vld [vmem:[%s0 + $0x38] sm:$0xff]
  %v42 = vld [vmem:[%s3] sm:$0x1]
  %v44 = vlaneseq
  %v45 = vshrl.u32 %v44, 7
  %v46 = vsub.s32 0, %v45
  %v47 = vrot.slane %v42, %v46
  %vm49 = vcmask 31744
  %v51 = vsel %vm49, %v34, 0
  %v54 = vsel %vm49, %v35, 0
  %v57 = vsel %vm49, %v36, 0
  %v60 = vsel %vm49, %v37, 0
  %v63 = vsel %vm49, %v38, 0
  %v66 = vsel %vm49, %v39, 0
  %v69 = vsel %vm49, %v40, 0
  %v72 = vsel %vm49, %v41, 0
  %vm74 = vcmask 1043456
  %v76 = vsel %vm74, %v29, 0
  %78 = vmatprep.subr.mxu0 0.0
  %79 = vmatpush1.msra.mxu0 %v76
  %80 = vmatprep.subr.mxu0 0.0
  %81 = vmatpush1.msra.mxu0 0.0
  %82 = vmatprep.subr.mxu0 0.0
  %83 = vmatpush1.msra.mxu0 0.0
  %84 = vmatprep.subr.mxu0 0.0
  %85 = vmatpush1.msra.mxu0 0.0
  %86 = vmatprep.subr.mxu0 0.0
  %87 = vmatpush1.msra.mxu0 0.0
  %88 = vmatprep.subr.mxu0 0.0
  %89 = vmatpush1.msra.mxu0 0.0
  %90 = vmatprep.subr.mxu0 0.0
  %91 = vmatpush1.msra.mxu0 0.0
  %92 = vmatprep.subr.mxu0 0.0
  %93 = vmatpush1.msra.mxu0 0.0
  %94 = vmatprep.subr.mxu0 0.0
  %95 = vmatpush1.msra.mxu0 0.0
  %96 = vmatprep.subr.mxu0 0.0
  %97 = vmatpush1.msra.mxu0 0.0
  %98 = vmatprep.subr.mxu0 0.0
  %99 = vmatpush1.msra.mxu0 0.0
  %100 = vmatprep.subr.mxu0 0.0
  %101 = vmatpush1.msra.mxu0 0.0
  %102 = vmatprep.subr.mxu0 0.0
  %103 = vmatpush1.msra.mxu0 0.0
  %104 = vmatprep.subr.mxu0 0.0
  %105 = vmatpush1.msra.mxu0 0.0
  %106 = vmatprep.subr.mxu0 0.0
  %107 = vmatpush1.msra.mxu0 0.0
  %108 = vmatprep.subr.mxu0 0.0
  %109 = vmatpush1.msra.mxu0 0.0
  %110 = vmatprep.subr.mxu0 0.0
  %111 = vmatpush1.msra.mxu0 0.0
  %112 = vmatprep.subr.mxu0 0.0
  %113 = vmatpush1.msra.mxu0 0.0
  %114 = vmatprep.subr.mxu0 0.0
  %115 = vmatpush1.msra.mxu0 0.0
  %116 = vmatprep.subr.mxu0 0.0
  %117 = vmatpush1.msra.mxu0 0.0
  %118 = vmatprep.subr.mxu0 0.0
  %119 = vmatpush1.msra.mxu0 0.0
  %120 = vmatprep.subr.mxu0 0.0
  %121 = vmatpush1.msra.mxu0 0.0
  %122 = vmatprep.subr.mxu0 0.0
  %123 = vmatpush1.msra.mxu0 0.0
  %124 = vmatprep.subr.mxu0 0.0
  %125 = vmatpush1.msra.mxu0 0.0
  %126 = vmatprep.subr.mxu0 0.0
  %127 = vmatpush1.msra.mxu0 0.0
  %128 = vmatprep.subr.mxu0 0.0
  %129 = vmatpush1.msra.mxu0 0.0
  %130 = vmatprep.subr.mxu0 0.0
  %131 = vmatpush1.msra.mxu0 0.0
  %132 = vmatprep.subr.mxu0 0.0
  %133 = vmatpush1.msra.mxu0 0.0
  %134 = vmatprep.subr.mxu0 0.0
  %135 = vmatpush1.msra.mxu0 0.0
  %136 = vmatprep.subr.mxu0 0.0
  %137 = vmatpush1.msra.mxu0 0.0
  %138 = vmatprep.subr.mxu0 0.0
  %139 = vmatpush1.msra.mxu0 0.0
  %140 = vmatprep.subr.mxu0 0.0
  %141 = vmatpush1.msra.mxu0 0.0
  %142 = vmatprep.mubr.f32.mxu0 0.0
  %143 = vmatmul.mubr.f32.gmra.mrb[0].mxu0 %v51
  %v144 = vpop.f32.mrb[0].mxu0
  %v145 = vadd.f32 %v47, %v144
  %v146 = vpop.f32.mrb[0].mxu0
  %147 = vmatprep.mubr.f32.mxu0 0.0
  %148 = vmatmul.mubr.f32.gmra.mrb[0].mxu0 %v54
  %v149 = vpop.f32.mrb[0].mxu0
  %v150 = vadd.f32 %v47, %v149
  %v151 = vpop.f32.mrb[0].mxu0
  %152 = vmatprep.mubr.f32.mxu0 0.0
  %153 = vmatmul.mubr.f32.gmra.mrb[0].mxu0 %v57
  %v154 = vpop.f32.mrb[0].mxu0
  %v155 = vadd.f32 %v47, %v154
  %v156 = vpop.f32.mrb[0].mxu0
  %157 = vmatprep.mubr.f32.mxu0 0.0
  %158 = vmatmul.mubr.f32.gmra.mrb[0].mxu0 %v60
  %v159 = vpop.f32.mrb[0].mxu0
  %v160 = vadd.f32 %v47, %v159
  %v161 = vpop.f32.mrb[0].mxu0
  %162 = vmatprep.mubr.f32.mxu0 0.0
  %163 = vmatmul.mubr.f32.gmra.mrb[0].mxu0 %v63
  %v164 = vpop.f32.mrb[0].mxu0
  %v165 = vadd.f32 %v47, %v164
  %v166 = vpop.f32.mrb[0].mxu0
  %167 = vmatprep.mubr.f32.mxu0 0.0
  %168 = vmatmul.mubr.f32.gmra.mrb[0].mxu0 %v66
  %v169 = vpop.f32.mrb[0].mxu0
  %v170 = vadd.f32 %v47, %v169
  %v171 = vpop.f32.mrb[0].mxu0
  %172 = vmatprep.mubr.f32.mxu0 0.0
  %173 = vmatmul.mubr.f32.gmra.mrb[0].mxu0 %v69
  %v174 = vpop.f32.mrb[0].mxu0
  %v175 = vadd.f32 %v47, %v174
  %v176 = vpop.f32.mrb[0].mxu0
  %177 = vmatprep.mubr.f32.mxu0 0.0
  %178 = vmatmul.mubr.f32.gmra.mrb[0].mxu0 %v72
  %v179 = vpop.f32.mrb[0].mxu0
  %v180 = vadd.f32 %v47, %v179
  %v181 = vpop.f32.mrb[0].mxu0
  %182 = vdwg.mxu0
  %183 = vst [vmem:[#allocation2] sm:$0xff] %v145
  %184 = vst [vmem:[#allocation2 + $0x8] sm:$0xff] %v150
  %185 = vst [vmem:[#allocation2 + $0x10] sm:$0xff] %v155
  %186 = vst [vmem:[#allocation2 + $0x18] sm:$0xff] %v160
  %187 = vst [vmem:[#allocation2 + $0x20] sm:$0xff] %v165
  %188 = vst [vmem:[#allocation2 + $0x28] sm:$0xff] %v170
  %189 = vst [vmem:[#allocation2 + $0x30] sm:$0xff] %v175
  %190 = vst [vmem:[#allocation2 + $0x38] sm:$0xff] %v180
  %v191 = vlaneseq
  %v192 = vand.u32 %v191, 127
  %vm193 = vcmp.ge.s32.totalorder %v192, 64
  %vm194 = vcmp.lt.s32.totalorder %v192, 96
  %vm195 = vmand %vm193, %vm194
  %v196 = vld [vmem:[#allocation2] sm:$0xff]
  %vm197 = vcmask 261120
  %v199 = vsel %vm197, 0.0, 0
  %201 = vmatprep.subr.mxu0 0.0
  %202 = vmatpush1.msra.mxu0 %v30
  %203 = vmatprep.subr.mxu0 0.0
  %204 = vmatpush1.msra.mxu0 %v31
  %205 = vmatprep.subr.mxu0 0.0
  %206 = vmatpush1.msra.mxu0 %v32
  %207 = vmatprep.subr.mxu0 0.0
  %208 = vmatpush1.msra.mxu0 %v33
  %209 = vmatprep.subr.mxu0 0.0
  %210 = vmatpush1.msra.mxu0 0.0
  %211 = vmatprep.subr.mxu0 0.0
  %212 = vmatpush1.msra.mxu0 0.0
  %213 = vmatprep.subr.mxu0 0.0
  %214 = vmatpush1.msra.mxu0 0.0
  %215 = vmatprep.subr.mxu0 0.0
  %216 = vmatpush1.msra.mxu0 0.0
  %217 = vmatprep.subr.mxu0 0.0
  %218 = vmatpush1.msra.mxu0 0.0
  %219 = vmatprep.subr.mxu0 0.0
  %220 = vmatpush1.msra.mxu0 0.0
  %221 = vmatprep.subr.mxu0 0.0
  %222 = vmatpush1.msra.mxu0 0.0
  %223 = vmatprep.subr.mxu0 0.0
  %224 = vmatpush1.msra.mxu0 0.0
  %225 = vmatprep.subr.mxu0 0.0
  %226 = vmatpush1.msra.mxu0 0.0
  %227 = vmatprep.subr.mxu0 0.0
  %228 = vmatpush1.msra.mxu0 0.0
  %229 = vmatprep.subr.mxu0 0.0
  %230 = vmatpush1.msra.mxu0 0.0
  %231 = vmatprep.subr.mxu0 0.0
  %232 = vmatpush1.msra.mxu0 0.0
  %233 = vmatprep.subr.mxu0 0.0
  %234 = vmatpush1.msra.mxu0 0.0
  %235 = vmatprep.subr.mxu0 0.0
  %236 = vmatpush1.msra.mxu0 0.0
  %237 = vmatprep.subr.mxu0 0.0
  %238 = vmatpush1.msra.mxu0 0.0
  %239 = vmatprep.subr.mxu0 0.0
  %240 = vmatpush1.msra.mxu0 0.0
  %241 = vmatprep.subr.mxu0 0.0
  %242 = vmatpush1.msra.mxu0 0.0
  %243 = vmatprep.subr.mxu0 0.0
  %244 = vmatpush1.msra.mxu0 0.0
  %245 = vmatprep.subr.mxu0 0.0
  %246 = vmatpush1.msra.mxu0 0.0
  %247 = vmatprep.subr.mxu0 0.0
  %248 = vmatpush1.msra.mxu0 0.0
  %249 = vmatprep.subr.mxu0 0.0
  %250 = vmatpush1.msra.mxu0 0.0
  %251 = vmatprep.subr.mxu0 0.0
  %252 = vmatpush1.msra.mxu0 0.0
  %253 = vmatprep.subr.mxu0 0.0
  %254 = vmatpush1.msra.mxu0 0.0
  %255 = vmatprep.subr.mxu0 0.0
  %256 = vmatpush1.msra.mxu0 0.0
  %257 = vmatprep.subr.mxu0 0.0
  %258 = vmatpush1.msra.mxu0 0.0
  %259 = vmatprep.subr.mxu0 0.0
  %260 = vmatpush1.msra.mxu0 0.0
  %261 = vmatprep.subr.mxu0 0.0
  %262 = vmatpush1.msra.mxu0 0.0
  %263 = vmatprep.subr.mxu0 0.0
  %264 = vmatpush1.msra.mxu0 0.0
  %265 = vmatprep.mubr.f32.mxu0 0.0
  %266 = vmatmul.mubr.f32.gmra.mrb[0].mxu0 %v199
  %v267 = vpop.f32.mrb[0].mxu0
  %v268 = vadd.f32 0.0, %v267
  %v269 = vpop.f32.mrb[0].mxu0
  %270 = vdwg.mxu0
  %v271 = vadd.f32 %v196, %v268
  %v272 = vmul.f32 %v271, 0.5
  %v273 = vsel %vm195, %v271, %v272
  %v274 = vtanh.pop %v273
  %v275 = vmul.f32 %v274, 0.5
  %v276 = vadd.f32 %v275, 0.5
  %v277 = vsel %vm195, %v274, %v276
  %v278 = vmul.f32 %v277, 0.0
  %280 = vrot.lane.b32.xlu0 %v277, 64
  %v281 = vpop.permute.xlu0 %280
  %v283 = vmul.f32 %v277, %v281
  %285 = vrot.lane.b32.xlu0 %v283, 32
  %v286 = vpop.permute.xlu0 %285
  %v288 = vadd.f32 %v278, %v286
  %v289 = vtanh.pop %v288
  %291 = vrot.lane.b32.xlu0 %v289, 64
  %v292 = vpop.permute.xlu0 %291
  %v294 = vmul.f32 %v277, %v292
  %v295 = vld [vmem:[#allocation2 + $0x8] sm:$0xff]
  %297 = vrot.lane.b32.xlu0 %v294, 32
  %v298 = vpop.permute.xlu0 %297
  %v299 = vsel %vm197, %v298, 0
  %301 = vmatprep.subr.mxu0 0.0
  %302 = vmatpush1.msra.mxu0 %v30
  %303 = vmatprep.subr.mxu0 0.0
  %304 = vmatpush1.msra.mxu0 %v31
  %305 = vmatprep.subr.mxu0 0.0
  %306 = vmatpush1.msra.mxu0 %v32
  %307 = vmatprep.subr.mxu0 0.0
  %308 = vmatpush1.msra.mxu0 %v33
  %309 = vmatprep.subr.mxu0 0.0
  %310 = vmatpush1.msra.mxu0 0.0
  %311 = vmatprep.subr.mxu0 0.0
  %312 = vmatpush1.msra.mxu0 0.0
  %313 = vmatprep.subr.mxu0 0.0
  %314 = vmatpush1.msra.mxu0 0.0
  %315 = vmatprep.subr.mxu0 0.0
  %316 = vmatpush1.msra.mxu0 0.0
  %317 = vmatprep.subr.mxu0 0.0
  %318 = vmatpush1.msra.mxu0 0.0
  %319 = vmatprep.subr.mxu0 0.0
  %320 = vmatpush1.msra.mxu0 0.0
  %321 = vmatprep.subr.mxu0 0.0
  %322 = vmatpush1.msra.mxu0 0.0
  %323 = vmatprep.subr.mxu0 0.0
  %324 = vmatpush1.msra.mxu0 0.0
  %325 = vmatprep.subr.mxu0 0.0
  %326 = vmatpush1.msra.mxu0 0.0
  %327 = vmatprep.subr.mxu0 0.0
  %328 = vmatpush1.msra.mxu0 0.0
  %329 = vmatprep.subr.mxu0 0.0
  %330 = vmatpush1.msra.mxu0 0.0
  %331 = vmatprep.subr.mxu0 0.0
  %332 = vmatpush1.msra.mxu0 0.0
  %333 = vmatprep.subr.mxu0 0.0
  %334 = vmatpush1.msra.mxu0 0.0
  %335 = vmatprep.subr.mxu0 0.0
  %336 = vmatpush1.msra.mxu0 0.0
  %337 = vmatprep.subr.mxu0 0.0
  %338 = vmatpush1.msra.mxu0 0.0
  %339 = vmatprep.subr.mxu0 0.0
  %340 = vmatpush1.msra.mxu0 0.0
  %341 = vmatprep.subr.mxu0 0.0
  %342 = vmatpush1.msra.mxu0 0.0
  %343 = vmatprep.subr.mxu0 0.0
  %344 = vmatpush1.msra.mxu0 0.0
  %345 = vmatprep.subr.mxu0 0.0
  %346 = vmatpush1.msra.mxu0 0.0
  %347 = vmatprep.subr.mxu0 0.0
  %348 = vmatpush1.msra.mxu0 0.0
  %349 = vmatprep.subr.mxu0 0.0
  %350 = vmatpush1.msra.mxu0 0.0
  %351 = vmatprep.subr.mxu0 0.0
  %352 = vmatpush1.msra.mxu0 0.0
  %353 = vmatprep.subr.mxu0 0.0
  %354 = vmatpush1.msra.mxu0 0.0
  %355 = vmatprep.subr.mxu0 0.0
  %356 = vmatpush1.msra.mxu0 0.0
  %357 = vmatprep.subr.mxu0 0.0
  %358 = vmatpush1.msra.mxu0 0.0
  %359 = vmatprep.subr.mxu0 0.0
  %360 = vmatpush1.msra.mxu0 0.0
  %361 = vmatprep.subr.mxu0 0.0
  %362 = vmatpush1.msra.mxu0 0.0
  %363 = vmatprep.subr.mxu0 0.0
  %364 = vmatpush1.msra.mxu0 0.0
  %365 = vmatprep.mubr.f32.mxu0 0.0
  %366 = vmatmul.mubr.f32.gmra.mrb[0].mxu0 %v299
  %v367 = vpop.f32.mrb[0].mxu0
  %v368 = vadd.f32 0.0, %v367
  %v369 = vpop.f32.mrb[0].mxu0
  %370 = vdwg.mxu0
  %v371 = vadd.f32 %v295, %v368
  %v372 = vmul.f32 %v371, 0.5
  %v373 = vsel %vm195, %v371, %v372
  %v374 = vtanh.pop %v373
  %v375 = vmul.f32 %v374, 0.5
  %v376 = vadd.f32 %v375, 0.5
  %v377 = vsel %vm195, %v374, %v376
  %v378 = vmul.f32 %v377, %v288
  %380 = vrot.lane.b32.xlu0 %v377, 64
  %v381 = vpop.permute.xlu0 %380
  %v383 = vmul.f32 %v377, %v381
  %385 = vrot.lane.b32.xlu0 %v383, 32
  %v386 = vpop.permute.xlu0 %385
  %v388 = vadd.f32 %v378, %v386
  %v389 = vtanh.pop %v388
  %391 = vrot.lane.b32.xlu0 %v389, 64
  %v392 = vpop.permute.xlu0 %391
  %v394 = vmul.f32 %v377, %v392
  %v395 = vld [vmem:[#allocation2 + $0x10] sm:$0xff]
  %397 = vrot.lane.b32.xlu0 %v394, 32
  %v398 = vpop.permute.xlu0 %397
  %v399 = vsel %vm197, %v398, 0
  %401 = vmatprep.subr.mxu0 0.0
  %402 = vmatpush1.msra.mxu0 %v30
  %403 = vmatprep.subr.mxu0 0.0
  %404 = vmatpush1.msra.mxu0 %v31
  %405 = vmatprep.subr.mxu0 0.0
  %406 = vmatpush1.msra.mxu0 %v32
  %407 = vmatprep.subr.mxu0 0.0
  %408 = vmatpush1.msra.mxu0 %v33
  %409 = vmatprep.subr.mxu0 0.0
  %410 = vmatpush1.msra.mxu0 0.0
  %411 = vmatprep.subr.mxu0 0.0
  %412 = vmatpush1.msra.mxu0 0.0
  %413 = vmatprep.subr.mxu0 0.0
  %414 = vmatpush1.msra.mxu0 0.0
  %415 = vmatprep.subr.mxu0 0.0
  %416 = vmatpush1.msra.mxu0 0.0
  %417 = vmatprep.subr.mxu0 0.0
  %418 = vmatpush1.msra.mxu0 0.0
  %419 = vmatprep.subr.mxu0 0.0
  %420 = vmatpush1.msra.mxu0 0.0
  %421 = vmatprep.subr.mxu0 0.0
  %422 = vmatpush1.msra.mxu0 0.0
  %423 = vmatprep.subr.mxu0 0.0
  %424 = vmatpush1.msra.mxu0 0.0
  %425 = vmatprep.subr.mxu0 0.0
  %426 = vmatpush1.msra.mxu0 0.0
  %427 = vmatprep.subr.mxu0 0.0
  %428 = vmatpush1.msra.mxu0 0.0
  %429 = vmatprep.subr.mxu0 0.0
  %430 = vmatpush1.msra.mxu0 0.0
  %431 = vmatprep.subr.mxu0 0.0
  %432 = vmatpush1.msra.mxu0 0.0
  %433 = vmatprep.subr.mxu0 0.0
  %434 = vmatpush1.msra.mxu0 0.0
  %435 = vmatprep.subr.mxu0 0.0
  %436 = vmatpush1.msra.mxu0 0.0
  %437 = vmatprep.subr.mxu0 0.0
  %438 = vmatpush1.msra.mxu0 0.0
  %439 = vmatprep.subr.mxu0 0.0
  %440 = vmatpush1.msra.mxu0 0.0
  %441 = vmatprep.subr.mxu0 0.0
  %442 = vmatpush1.msra.mxu0 0.0
  %443 = vmatprep.subr.mxu0 0.0
  %444 = vmatpush1.msra.mxu0 0.0
  %445 = vmatprep.subr.mxu0 0.0
  %446 = vmatpush1.msra.mxu0 0.0
  %447 = vmatprep.subr.mxu0 0.0
  %448 = vmatpush1.msra.mxu0 0.0
  %449 = vmatprep.subr.mxu0 0.0
  %450 = vmatpush1.msra.mxu0 0.0
  %451 = vmatprep.subr.mxu0 0.0
  %452 = vmatpush1.msra.mxu0 0.0
  %453 = vmatprep.subr.mxu0 0.0
  %454 = vmatpush1.msra.mxu0 0.0
  %455 = vmatprep.subr.mxu0 0.0
  %456 = vmatpush1.msra.mxu0 0.0
  %457 = vmatprep.subr.mxu0 0.0
  %458 = vmatpush1.msra.mxu0 0.0
  %459 = vmatprep.subr.mxu0 0.0
  %460 = vmatpush1.msra.mxu0 0.0
  %461 = vmatprep.subr.mxu0 0.0
  %462 = vmatpush1.msra.mxu0 0.0
  %463 = vmatprep.subr.mxu0 0.0
  %464 = vmatpush1.msra.mxu0 0.0
  %465 = vmatprep.mubr.f32.mxu0 0.0
  %466 = vmatmul.mubr.f32.gmra.mrb[0].mxu0 %v399
  %v467 = vpop.f32.mrb[0].mxu0
  %v468 = vadd.f32 0.0, %v467
  %v469 = vpop.f32.mrb[0].mxu0
  %470 = vdwg.mxu0
  %v471 = vadd.f32 %v395, %v468
  %v472 = vmul.f32 %v471, 0.5
  %v473 = vsel %vm195, %v471, %v472
  %v474 = vtanh.pop %v473
  %v475 = vmul.f32 %v474, 0.5
  %v476 = vadd.f32 %v475, 0.5
  %v477 = vsel %vm195, %v474, %v476
  %v478 = vmul.f32 %v477, %v388
  %480 = vrot.lane.b32.xlu0 %v477, 64
  %v481 = vpop.permute.xlu0 %480
  %v483 = vmul.f32 %v477, %v481
  %485 = vrot.lane.b32.xlu0 %v483, 32
  %v486 = vpop.permute.xlu0 %485
  %v488 = vadd.f32 %v478, %v486
  %v489 = vtanh.pop %v488
  %491 = vrot.lane.b32.xlu0 %v489, 64
  %v492 = vpop.permute.xlu0 %491
  %v494 = vmul.f32 %v477, %v492
  %v495 = vld [vmem:[#allocation2 + $0x18] sm:$0xff]
  %497 = vrot.lane.b32.xlu0 %v494, 32
  %v498 = vpop.permute.xlu0 %497
  %v499 = vsel %vm197, %v498, 0
  %501 = vmatprep.subr.mxu0 0.0
  %502 = vmatpush1.msra.mxu0 %v30
  %503 = vmatprep.subr.mxu0 0.0
  %504 = vmatpush1.msra.mxu0 %v31
  %505 = vmatprep.subr.mxu0 0.0
  %506 = vmatpush1.msra.mxu0 %v32
  %507 = vmatprep.subr.mxu0 0.0
  %508 = vmatpush1.msra.mxu0 %v33
  %509 = vmatprep.subr.mxu0 0.0
  %510 = vmatpush1.msra.mxu0 0.0
  %511 = vmatprep.subr.mxu0 0.0
  %512 = vmatpush1.msra.mxu0 0.0
  %513 = vmatprep.subr.mxu0 0.0
  %514 = vmatpush1.msra.mxu0 0.0
  %515 = vmatprep.subr.mxu0 0.0
  %516 = vmatpush1.msra.mxu0 0.0
  %517 = vmatprep.subr.mxu0 0.0
  %518 = vmatpush1.msra.mxu0 0.0
  %519 = vmatprep.subr.mxu0 0.0
  %520 = vmatpush1.msra.mxu0 0.0
  %521 = vmatprep.subr.mxu0 0.0
  %522 = vmatpush1.msra.mxu0 0.0
  %523 = vmatprep.subr.mxu0 0.0
  %524 = vmatpush1.msra.mxu0 0.0
  %525 = vmatprep.subr.mxu0 0.0
  %526 = vmatpush1.msra.mxu0 0.0
  %527 = vmatprep.subr.mxu0 0.0
  %528 = vmatpush1.msra.mxu0 0.0
  %529 = vmatprep.subr.mxu0 0.0
  %530 = vmatpush1.msra.mxu0 0.0
  %531 = vmatprep.subr.mxu0 0.0
  %532 = vmatpush1.msra.mxu0 0.0
  %533 = vmatprep.subr.mxu0 0.0
  %534 = vmatpush1.msra.mxu0 0.0
  %535 = vmatprep.subr.mxu0 0.0
  %536 = vmatpush1.msra.mxu0 0.0
  %537 = vmatprep.subr.mxu0 0.0
  %538 = vmatpush1.msra.mxu0 0.0
  %539 = vmatprep.subr.mxu0 0.0
  %540 = vmatpush1.msra.mxu0 0.0
  %541 = vmatprep.subr.mxu0 0.0
  %542 = vmatpush1.msra.mxu0 0.0
  %543 = vmatprep.subr.mxu0 0.0
  %544 = vmatpush1.msra.mxu0 0.0
  %545 = vmatprep.subr.mxu0 0.0
  %546 = vmatpush1.msra.mxu0 0.0
  %547 = vmatprep.subr.mxu0 0.0
  %548 = vmatpush1.msra.mxu0 0.0
  %549 = vmatprep.subr.mxu0 0.0
  %550 = vmatpush1.msra.mxu0 0.0
  %551 = vmatprep.subr.mxu0 0.0
  %552 = vmatpush1.msra.mxu0 0.0
  %553 = vmatprep.subr.mxu0 0.0
  %554 = vmatpush1.msra.mxu0 0.0
  %555 = vmatprep.subr.mxu0 0.0
  %556 = vmatpush1.msra.mxu0 0.0
  %557 = vmatprep.subr.mxu0 0.0
  %558 = vmatpush1.msra.mxu0 0.0
  %559 = vmatprep.subr.mxu0 0.0
  %560 = vmatpush1.msra.mxu0 0.0
  %561 = vmatprep.subr.mxu0 0.0
  %562 = vmatpush1.msra.mxu0 0.0
  %563 = vmatprep.subr.mxu0 0.0
  %564 = vmatpush1.msra.mxu0 0.0
  %565 = vmatprep.mubr.f32.mxu0 0.0
  %566 = vmatmul.mubr.f32.gmra.mrb[0].mxu0 %v499
  %v567 = vpop.f32.mrb[0].mxu0
  %v568 = vadd.f32 0.0, %v567
  %v569 = vpop.f32.mrb[0].mxu0
  %570 = vdwg.mxu0
  %v571 = vadd.f32 %v495, %v568
  %v572 = vmul.f32 %v571, 0.5
  %v573 = vsel %vm195, %v571, %v572
  %v574 = vtanh.pop %v573
  %v575 = vmul.f32 %v574, 0.5
  %v576 = vadd.f32 %v575, 0.5
  %v577 = vsel %vm195, %v574, %v576
  %v578 = vmul.f32 %v577, %v488
  %580 = vrot.lane.b32.xlu0 %v577, 64
  %v581 = vpop.permute.xlu0 %580
  %v583 = vmul.f32 %v577, %v581
  %585 = vrot.lane.b32.xlu0 %v583, 32
  %v586 = vpop.permute.xlu0 %585
  %v588 = vadd.f32 %v578, %v586
  %v589 = vtanh.pop %v588
  %591 = vrot.lane.b32.xlu0 %v589, 64
  %v592 = vpop.permute.xlu0 %591
  %v594 = vmul.f32 %v577, %v592
  %v595 = vld [vmem:[#allocation2 + $0x20] sm:$0xff]
  %597 = vrot.lane.b32.xlu0 %v594, 32
  %v598 = vpop.permute.xlu0 %597
  %v599 = vsel %vm197, %v598, 0
  %601 = vmatprep.subr.mxu0 0.0
  %602 = vmatpush1.msra.mxu0 %v30
  %603 = vmatprep.subr.mxu0 0.0
  %604 = vmatpush1.msra.mxu0 %v31
  %605 = vmatprep.subr.mxu0 0.0
  %606 = vmatpush1.msra.mxu0 %v32
  %607 = vmatprep.subr.mxu0 0.0
  %608 = vmatpush1.msra.mxu0 %v33
  %609 = vmatprep.subr.mxu0 0.0
  %610 = vmatpush1.msra.mxu0 0.0
  %611 = vmatprep.subr.mxu0 0.0
  %612 = vmatpush1.msra.mxu0 0.0
  %613 = vmatprep.subr.mxu0 0.0
  %614 = vmatpush1.msra.mxu0 0.0
  %615 = vmatprep.subr.mxu0 0.0
  %616 = vmatpush1.msra.mxu0 0.0
  %617 = vmatprep.subr.mxu0 0.0
  %618 = vmatpush1.msra.mxu0 0.0
  %619 = vmatprep.subr.mxu0 0.0
  %620 = vmatpush1.msra.mxu0 0.0
  %621 = vmatprep.subr.mxu0 0.0
  %622 = vmatpush1.msra.mxu0 0.0
  %623 = vmatprep.subr.mxu0 0.0
  %624 = vmatpush1.msra.mxu0 0.0
  %625 = vmatprep.subr.mxu0 0.0
  %626 = vmatpush1.msra.mxu0 0.0
  %627 = vmatprep.subr.mxu0 0.0
  %628 = vmatpush1.msra.mxu0 0.0
  %629 = vmatprep.subr.mxu0 0.0
  %630 = vmatpush1.msra.mxu0 0.0
  %631 = vmatprep.subr.mxu0 0.0
  %632 = vmatpush1.msra.mxu0 0.0
  %633 = vmatprep.subr.mxu0 0.0
  %634 = vmatpush1.msra.mxu0 0.0
  %635 = vmatprep.subr.mxu0 0.0
  %636 = vmatpush1.msra.mxu0 0.0
  %637 = vmatprep.subr.mxu0 0.0
  %638 = vmatpush1.msra.mxu0 0.0
  %639 = vmatprep.subr.mxu0 0.0
  %640 = vmatpush1.msra.mxu0 0.0
  %641 = vmatprep.subr.mxu0 0.0
  %642 = vmatpush1.msra.mxu0 0.0
  %643 = vmatprep.subr.mxu0 0.0
  %644 = vmatpush1.msra.mxu0 0.0
  %645 = vmatprep.subr.mxu0 0.0
  %646 = vmatpush1.msra.mxu0 0.0
  %647 = vmatprep.subr.mxu0 0.0
  %648 = vmatpush1.msra.mxu0 0.0
  %649 = vmatprep.subr.mxu0 0.0
  %650 = vmatpush1.msra.mxu0 0.0
  %651 = vmatprep.subr.mxu0 0.0
  %652 = vmatpush1.msra.mxu0 0.0
  %653 = vmatprep.subr.mxu0 0.0
  %654 = vmatpush1.msra.mxu0 0.0
  %655 = vmatprep.subr.mxu0 0.0
  %656 = vmatpush1.msra.mxu0 0.0
  %657 = vmatprep.subr.mxu0 0.0
  %658 = vmatpush1.msra.mxu0 0.0
  %659 = vmatprep.subr.mxu0 0.0
  %660 = vmatpush1.msra.mxu0 0.0
  %661 = vmatprep.subr.mxu0 0.0
  %662 = vmatpush1.msra.mxu0 0.0
  %663 = vmatprep.subr.mxu0 0.0
  %664 = vmatpush1.msra.mxu0 0.0
  %665 = vmatprep.mubr.f32.mxu0 0.0
  %666 = vmatmul.mubr.f32.gmra.mrb[0].mxu0 %v599
  %v667 = vpop.f32.mrb[0].mxu0
  %v668 = vadd.f32 0.0, %v667
  %v669 = vpop.f32.mrb[0].mxu0
  %670 = vdwg.mxu0
  %v671 = vadd.f32 %v595, %v668
  %v672 = vmul.f32 %v671, 0.5
  %v673 = vsel %vm195, %v671, %v672
  %v674 = vtanh.pop %v673
  %v675 = vmul.f32 %v674, 0.5
  %v676 = vadd.f32 %v675, 0.5
  %v677 = vsel %vm195, %v674, %v676
  %v678 = vmul.f32 %v677, %v588
  %680 = vrot.lane.b32.xlu0 %v677, 64
  %v681 = vpop.permute.xlu0 %680
  %v683 = vmul.f32 %v677, %v681
  %685 = vrot.lane.b32.xlu0 %v683, 32
  %v686 = vpop.permute.xlu0 %685
  %v688 = vadd.f32 %v678, %v686
  %v689 = vtanh.pop %v688
  %691 = vrot.lane.b32.xlu0 %v689, 64
  %v692 = vpop.permute.xlu0 %691
  %v694 = vmul.f32 %v677, %v692
  %v695 = vld [vmem:[#allocation2 + $0x28] sm:$0xff]
  %697 = vrot.lane.b32.xlu0 %v694, 32
  %v698 = vpop.permute.xlu0 %697
  %v699 = vsel %vm197, %v698, 0
  %701 = vmatprep.subr.mxu0 0.0
  %702 = vmatpush1.msra.mxu0 %v30
  %703 = vmatprep.subr.mxu0 0.0
  %704 = vmatpush1.msra.mxu0 %v31
  %705 = vmatprep.subr.mxu0 0.0
  %706 = vmatpush1.msra.mxu0 %v32
  %707 = vmatprep.subr.mxu0 0.0
  %708 = vmatpush1.msra.mxu0 %v33
  %709 = vmatprep.subr.mxu0 0.0
  %710 = vmatpush1.msra.mxu0 0.0
  %711 = vmatprep.subr.mxu0 0.0
  %712 = vmatpush1.msra.mxu0 0.0
  %713 = vmatprep.subr.mxu0 0.0
  %714 = vmatpush1.msra.mxu0 0.0
  %715 = vmatprep.subr.mxu0 0.0
  %716 = vmatpush1.msra.mxu0 0.0
  %717 = vmatprep.subr.mxu0 0.0
  %718 = vmatpush1.msra.mxu0 0.0
  %719 = vmatprep.subr.mxu0 0.0
  %720 = vmatpush1.msra.mxu0 0.0
  %721 = vmatprep.subr.mxu0 0.0
  %722 = vmatpush1.msra.mxu0 0.0
  %723 = vmatprep.subr.mxu0 0.0
  %724 = vmatpush1.msra.mxu0 0.0
  %725 = vmatprep.subr.mxu0 0.0
  %726 = vmatpush1.msra.mxu0 0.0
  %727 = vmatprep.subr.mxu0 0.0
  %728 = vmatpush1.msra.mxu0 0.0
  %729 = vmatprep.subr.mxu0 0.0
  %730 = vmatpush1.msra.mxu0 0.0
  %731 = vmatprep.subr.mxu0 0.0
  %732 = vmatpush1.msra.mxu0 0.0
  %733 = vmatprep.subr.mxu0 0.0
  %734 = vmatpush1.msra.mxu0 0.0
  %735 = vmatprep.subr.mxu0 0.0
  %736 = vmatpush1.msra.mxu0 0.0
  %737 = vmatprep.subr.mxu0 0.0
  %738 = vmatpush1.msra.mxu0 0.0
  %739 = vmatprep.subr.mxu0 0.0
  %740 = vmatpush1.msra.mxu0 0.0
  %741 = vmatprep.subr.mxu0 0.0
  %742 = vmatpush1.msra.mxu0 0.0
  %743 = vmatprep.subr.mxu0 0.0
  %744 = vmatpush1.msra.mxu0 0.0
  %745 = vmatprep.subr.mxu0 0.0
  %746 = vmatpush1.msra.mxu0 0.0
  %747 = vmatprep.subr.mxu0 0.0
  %748 = vmatpush1.msra.mxu0 0.0
  %749 = vmatprep.subr.mxu0 0.0
  %750 = vmatpush1.msra.mxu0 0.0
  %751 = vmatprep.subr.mxu0 0.0
  %752 = vmatpush1.msra.mxu0 0.0
  %753 = vmatprep.subr.mxu0 0.0
  %754 = vmatpush1.msra.mxu0 0.0
  %755 = vmatprep.subr.mxu0 0.0
  %756 = vmatpush1.msra.mxu0 0.0
  %757 = vmatprep.subr.mxu0 0.0
  %758 = vmatpush1.msra.mxu0 0.0
  %759 = vmatprep.subr.mxu0 0.0
  %760 = vmatpush1.msra.mxu0 0.0
  %761 = vmatprep.subr.mxu0 0.0
  %762 = vmatpush1.msra.mxu0 0.0
  %763 = vmatprep.subr.mxu0 0.0
  %764 = vmatpush1.msra.mxu0 0.0
  %765 = vmatprep.mubr.f32.mxu0 0.0
  %766 = vmatmul.mubr.f32.gmra.mrb[0].mxu0 %v699
  %v767 = vpop.f32.mrb[0].mxu0
  %v768 = vadd.f32 0.0, %v767
  %v769 = vpop.f32.mrb[0].mxu0
  %770 = vdwg.mxu0
  %v771 = vadd.f32 %v695, %v768
  %v772 = vmul.f32 %v771, 0.5
  %v773 = vsel %vm195, %v771, %v772
  %v774 = vtanh.pop %v773
  %v775 = vmul.f32 %v774, 0.5
  %v776 = vadd.f32 %v775, 0.5
  %v777 = vsel %vm195, %v774, %v776
  %v778 = vmul.f32 %v777, %v688
  %780 = vrot.lane.b32.xlu0 %v777, 64
  %v781 = vpop.permute.xlu0 %780
  %v783 = vmul.f32 %v777, %v781
  %785 = vrot.lane.b32.xlu0 %v783, 32
  %v786 = vpop.permute.xlu0 %785
  %v788 = vadd.f32 %v778, %v786
  %v789 = vtanh.pop %v788
  %791 = vrot.lane.b32.xlu0 %v789, 64
  %v792 = vpop.permute.xlu0 %791
  %v794 = vmul.f32 %v777, %v792
  %v795 = vld [vmem:[#allocation2 + $0x30] sm:$0xff]
  %797 = vrot.lane.b32.xlu0 %v794, 32
  %v798 = vpop.permute.xlu0 %797
  %v799 = vsel %vm197, %v798, 0
  %801 = vmatprep.subr.mxu0 0.0
  %802 = vmatpush1.msra.mxu0 %v30
  %803 = vmatprep.subr.mxu0 0.0
  %804 = vmatpush1.msra.mxu0 %v31
  %805 = vmatprep.subr.mxu0 0.0
  %806 = vmatpush1.msra.mxu0 %v32
  %807 = vmatprep.subr.mxu0 0.0
  %808 = vmatpush1.msra.mxu0 %v33
  %809 = vmatprep.subr.mxu0 0.0
  %810 = vmatpush1.msra.mxu0 0.0
  %811 = vmatprep.subr.mxu0 0.0
  %812 = vmatpush1.msra.mxu0 0.0
  %813 = vmatprep.subr.mxu0 0.0
  %814 = vmatpush1.msra.mxu0 0.0
  %815 = vmatprep.subr.mxu0 0.0
  %816 = vmatpush1.msra.mxu0 0.0
  %817 = vmatprep.subr.mxu0 0.0
  %818 = vmatpush1.msra.mxu0 0.0
  %819 = vmatprep.subr.mxu0 0.0
  %820 = vmatpush1.msra.mxu0 0.0
  %821 = vmatprep.subr.mxu0 0.0
  %822 = vmatpush1.msra.mxu0 0.0
  %823 = vmatprep.subr.mxu0 0.0
  %824 = vmatpush1.msra.mxu0 0.0
  %825 = vmatprep.subr.mxu0 0.0
  %826 = vmatpush1.msra.mxu0 0.0
  %827 = vmatprep.subr.mxu0 0.0
  %828 = vmatpush1.msra.mxu0 0.0
  %829 = vmatprep.subr.mxu0 0.0
  %830 = vmatpush1.msra.mxu0 0.0
  %831 = vmatprep.subr.mxu0 0.0
  %832 = vmatpush1.msra.mxu0 0.0
  %833 = vmatprep.subr.mxu0 0.0
  %834 = vmatpush1.msra.mxu0 0.0
  %835 = vmatprep.subr.mxu0 0.0
  %836 = vmatpush1.msra.mxu0 0.0
  %837 = vmatprep.subr.mxu0 0.0
  %838 = vmatpush1.msra.mxu0 0.0
  %839 = vmatprep.subr.mxu0 0.0
  %840 = vmatpush1.msra.mxu0 0.0
  %841 = vmatprep.subr.mxu0 0.0
  %842 = vmatpush1.msra.mxu0 0.0
  %843 = vmatprep.subr.mxu0 0.0
  %844 = vmatpush1.msra.mxu0 0.0
  %845 = vmatprep.subr.mxu0 0.0
  %846 = vmatpush1.msra.mxu0 0.0
  %847 = vmatprep.subr.mxu0 0.0
  %848 = vmatpush1.msra.mxu0 0.0
  %849 = vmatprep.subr.mxu0 0.0
  %850 = vmatpush1.msra.mxu0 0.0
  %851 = vmatprep.subr.mxu0 0.0
  %852 = vmatpush1.msra.mxu0 0.0
  %853 = vmatprep.subr.mxu0 0.0
  %854 = vmatpush1.msra.mxu0 0.0
  %855 = vmatprep.subr.mxu0 0.0
  %856 = vmatpush1.msra.mxu0 0.0
  %857 = vmatprep.subr.mxu0 0.0
  %858 = vmatpush1.msra.mxu0 0.0
  %859 = vmatprep.subr.mxu0 0.0
  %860 = vmatpush1.msra.mxu0 0.0
  %861 = vmatprep.subr.mxu0 0.0
  %862 = vmatpush1.msra.mxu0 0.0
  %863 = vmatprep.subr.mxu0 0.0
  %864 = vmatpush1.msra.mxu0 0.0
  %865 = vmatprep.mubr.f32.mxu0 0.0
  %866 = vmatmul.mubr.f32.gmra.mrb[0].mxu0 %v799
  %v867 = vpop.f32.mrb[0].mxu0
  %v868 = vadd.f32 0.0, %v867
  %v869 = vpop.f32.mrb[0].mxu0
  %870 = vdwg.mxu0
  %v871 = vadd.f32 %v795, %v868
  %v872 = vmul.f32 %v871, 0.5
  %v873 = vsel %vm195, %v871, %v872
  %v874 = vtanh.pop %v873
  %v875 = vmul.f32 %v874, 0.5
  %v876 = vadd.f32 %v875, 0.5
  %v877 = vsel %vm195, %v874, %v876
  %v878 = vmul.f32 %v877, %v788
  %880 = vrot.lane.b32.xlu0 %v877, 64
  %v881 = vpop.permute.xlu0 %880
  %v883 = vmul.f32 %v877, %v881
  %885 = vrot.lane.b32.xlu0 %v883, 32
  %v886 = vpop.permute.xlu0 %885
  %v888 = vadd.f32 %v878, %v886
  %v889 = vtanh.pop %v888
  %891 = vrot.lane.b32.xlu0 %v889, 64
  %v892 = vpop.permute.xlu0 %891
  %v894 = vmul.f32 %v877, %v892
  %v895 = vld [vmem:[#allocation2 + $0x38] sm:$0xff]
  %897 = vrot.lane.b32.xlu0 %v894, 32
  %v898 = vpop.permute.xlu0 %897
  %v899 = vsel %vm197, %v898, 0
  %901 = vmatprep.subr.mxu0 0.0
  %902 = vmatpush1.msra.mxu0 %v30
  %903 = vmatprep.subr.mxu0 0.0
  %904 = vmatpush1.msra.mxu0 %v31
  %905 = vmatprep.subr.mxu0 0.0
  %906 = vmatpush1.msra.mxu0 %v32
  %907 = vmatprep.subr.mxu0 0.0
  %908 = vmatpush1.msra.mxu0 %v33
  %909 = vmatprep.subr.mxu0 0.0
  %910 = vmatpush1.msra.mxu0 0.0
  %911 = vmatprep.subr.mxu0 0.0
  %912 = vmatpush1.msra.mxu0 0.0
  %913 = vmatprep.subr.mxu0 0.0
  %914 = vmatpush1.msra.mxu0 0.0
  %915 = vmatprep.subr.mxu0 0.0
  %916 = vmatpush1.msra.mxu0 0.0
  %917 = vmatprep.subr.mxu0 0.0
  %918 = vmatpush1.msra.mxu0 0.0
  %919 = vmatprep.subr.mxu0 0.0
  %920 = vmatpush1.msra.mxu0 0.0
  %921 = vmatprep.subr.mxu0 0.0
  %922 = vmatpush1.msra.mxu0 0.0
  %923 = vmatprep.subr.mxu0 0.0
  %924 = vmatpush1.msra.mxu0 0.0
  %925 = vmatprep.subr.mxu0 0.0
  %926 = vmatpush1.msra.mxu0 0.0
  %927 = vmatprep.subr.mxu0 0.0
  %928 = vmatpush1.msra.mxu0 0.0
  %929 = vmatprep.subr.mxu0 0.0
  %930 = vmatpush1.msra.mxu0 0.0
  %931 = vmatprep.subr.mxu0 0.0
  %932 = vmatpush1.msra.mxu0 0.0
  %933 = vmatprep.subr.mxu0 0.0
  %934 = vmatpush1.msra.mxu0 0.0
  %935 = vmatprep.subr.mxu0 0.0
  %936 = vmatpush1.msra.mxu0 0.0
  %937 = vmatprep.subr.mxu0 0.0
  %938 = vmatpush1.msra.mxu0 0.0
  %939 = vmatprep.subr.mxu0 0.0
  %940 = vmatpush1.msra.mxu0 0.0
  %941 = vmatprep.subr.mxu0 0.0
  %942 = vmatpush1.msra.mxu0 0.0
  %943 = vmatprep.subr.mxu0 0.0
  %944 = vmatpush1.msra.mxu0 0.0
  %945 = vmatprep.subr.mxu0 0.0
  %946 = vmatpush1.msra.mxu0 0.0
  %947 = vmatprep.subr.mxu0 0.0
  %948 = vmatpush1.msra.mxu0 0.0
  %949 = vmatprep.subr.mxu0 0.0
  %950 = vmatpush1.msra.mxu0 0.0
  %951 = vmatprep.subr.mxu0 0.0
  %952 = vmatpush1.msra.mxu0 0.0
  %953 = vmatprep.subr.mxu0 0.0
  %954 = vmatpush1.msra.mxu0 0.0
  %955 = vmatprep.subr.mxu0 0.0
  %956 = vmatpush1.msra.mxu0 0.0
  %957 = vmatprep.subr.mxu0 0.0
  %958 = vmatpush1.msra.mxu0 0.0
  %959 = vmatprep.subr.mxu0 0.0
  %960 = vmatpush1.msra.mxu0 0.0
  %961 = vmatprep.subr.mxu0 0.0
  %962 = vmatpush1.msra.mxu0 0.0
  %963 = vmatprep.subr.mxu0 0.0
  %964 = vmatpush1.msra.mxu0 0.0
  %965 = vmatprep.mubr.f32.mxu0 0.0
  %966 = vmatmul.mubr.f32.gmra.mrb[0].mxu0 %v899
  %v967 = vpop.f32.mrb[0].mxu0
  %v968 = vadd.f32 0.0, %v967
  %v969 = vpop.f32.mrb[0].mxu0
  %970 = vdwg.mxu0
  %v971 = vadd.f32 %v895, %v968
  %v972 = vmul.f32 %v971, 0.5
  %v973 = vsel %vm195, %v971, %v972
  %v974 = vtanh.pop %v973
  %v975 = vmul.f32 %v974, 0.5
  %v976 = vadd.f32 %v975, 0.5
  %v977 = vsel %vm195, %v974, %v976
  %v978 = vmul.f32 %v977, %v888
  %980 = vrot.lane.b32.xlu0 %v977, 64
  %v981 = vpop.permute.xlu0 %980
  %v983 = vmul.f32 %v977, %v981
  %985 = vrot.lane.b32.xlu0 %v983, 32
  %v986 = vpop.permute.xlu0 %985
  %v988 = vadd.f32 %v978, %v986
  %v989 = vtanh.pop %v988
  %991 = vrot.lane.b32.xlu0 %v989, 64
  %v992 = vpop.permute.xlu0 %991
  %v994 = vmul.f32 %v977, %v992
  %v995 = vld [vmem:[%s4] sm:$0xff]
  %v996 = vld [vmem:[%s4 + $0x8] sm:$0xff]
  %v997 = vld [vmem:[%s4 + $0x10] sm:$0xff]
  %v998 = vld [vmem:[%s4 + $0x18] sm:$0xff]
  %v999 = vld [vmem:[%s5] sm:$0x1]
  %v1001 = vlaneseq
  %v1002 = vshrl.u32 %v1001, 7
  %v1003 = vsub.s32 0, %v1002
  %v1004 = vrot.slane %v999, %v1003
  %1007 = vrot.lane.b32.xlu0 %v994, 32
  %v1008 = vpop.permute.xlu0 %1007
  %v1009 = vsel %vm197, %v1008, 0
  %1011 = vmatprep.subr.mxu0 0.0
  %1012 = vmatpush1.msra.mxu0 %v995
  %1013 = vmatprep.subr.mxu0 0.0
  %1014 = vmatpush1.msra.mxu0 %v996
  %1015 = vmatprep.subr.mxu0 0.0
  %1016 = vmatpush1.msra.mxu0 %v997
  %1017 = vmatprep.subr.mxu0 0.0
  %1018 = vmatpush1.msra.mxu0 %v998
  %1019 = vmatprep.subr.mxu0 0.0
  %1020 = vmatpush1.msra.mxu0 0.0
  %1021 = vmatprep.subr.mxu0 0.0
  %1022 = vmatpush1.msra.mxu0 0.0
  %1023 = vmatprep.subr.mxu0 0.0
  %1024 = vmatpush1.msra.mxu0 0.0
  %1025 = vmatprep.subr.mxu0 0.0
  %1026 = vmatpush1.msra.mxu0 0.0
  %1027 = vmatprep.subr.mxu0 0.0
  %1028 = vmatpush1.msra.mxu0 0.0
  %1029 = vmatprep.subr.mxu0 0.0
  %1030 = vmatpush1.msra.mxu0 0.0
  %1031 = vmatprep.subr.mxu0 0.0
  %1032 = vmatpush1.msra.mxu0 0.0
  %1033 = vmatprep.subr.mxu0 0.0
  %1034 = vmatpush1.msra.mxu0 0.0
  %1035 = vmatprep.subr.mxu0 0.0
  %1036 = vmatpush1.msra.mxu0 0.0
  %1037 = vmatprep.subr.mxu0 0.0
  %1038 = vmatpush1.msra.mxu0 0.0
  %1039 = vmatprep.subr.mxu0 0.0
  %1040 = vmatpush1.msra.mxu0 0.0
  %1041 = vmatprep.subr.mxu0 0.0
  %1042 = vmatpush1.msra.mxu0 0.0
  %1043 = vmatprep.subr.mxu0 0.0
  %1044 = vmatpush1.msra.mxu0 0.0
  %1045 = vmatprep.subr.mxu0 0.0
  %1046 = vmatpush1.msra.mxu0 0.0
  %1047 = vmatprep.subr.mxu0 0.0
  %1048 = vmatpush1.msra.mxu0 0.0
  %1049 = vmatprep.subr.mxu0 0.0
  %1050 = vmatpush1.msra.mxu0 0.0
  %1051 = vmatprep.subr.mxu0 0.0
  %1052 = vmatpush1.msra.mxu0 0.0
  %1053 = vmatprep.subr.mxu0 0.0
  %1054 = vmatpush1.msra.mxu0 0.0
  %1055 = vmatprep.subr.mxu0 0.0
  %1056 = vmatpush1.msra.mxu0 0.0
  %1057 = vmatprep.subr.mxu0 0.0
  %1058 = vmatpush1.msra.mxu0 0.0
  %1059 = vmatprep.subr.mxu0 0.0
  %1060 = vmatpush1.msra.mxu0 0.0
  %1061 = vmatprep.subr.mxu0 0.0
  %1062 = vmatpush1.msra.mxu0 0.0
  %1063 = vmatprep.subr.mxu0 0.0
  %1064 = vmatpush1.msra.mxu0 0.0
  %1065 = vmatprep.subr.mxu0 0.0
  %1066 = vmatpush1.msra.mxu0 0.0
  %1067 = vmatprep.subr.mxu0 0.0
  %1068 = vmatpush1.msra.mxu0 0.0
  %1069 = vmatprep.subr.mxu0 0.0
  %1070 = vmatpush1.msra.mxu0 0.0
  %1071 = vmatprep.subr.mxu0 0.0
  %1072 = vmatpush1.msra.mxu0 0.0
  %1073 = vmatprep.subr.mxu0 0.0
  %1074 = vmatpush1.msra.mxu0 0.0
  %1075 = vmatprep.mubr.f32.mxu0 0.0
  %1076 = vmatmul.mubr.f32.gmra.mrb[0].mxu0 %v1009
  %v1077 = vpop.f32.mrb[0].mxu0
  %v1078 = vadd.f32 %v1004, %v1077
  %v1079 = vpop.f32.mrb[0].mxu0
  %1080 = vdwg.mxu0
  %v1081 = vmax.f32 %v1078, 0.0
  %v1082 = vld [vmem:[%s6] sm:$0xff]
  %v1083 = vld [vmem:[%s6 + $0x8] sm:$0xff]
  %v1084 = vld [vmem:[%s7] sm:$0x1]
  %v1086 = vlaneseq
  %v1087 = vshrl.u32 %v1086, 7
  %v1088 = vsub.s32 0, %v1087
  %v1089 = vrot.slane %v1084, %v1088
  %vm1091 = vcmask 130048
  %v1093 = vsel %vm1091, %v1081, 0
  %1095 = vmatprep.subr.mxu0 0.0
  %1096 = vmatpush1.msra.mxu0 %v1082
  %1097 = vmatprep.subr.mxu0 0.0
  %1098 = vmatpush1.msra.mxu0 %v1083
  %1099 = vmatprep.subr.mxu0 0.0
  %1100 = vmatpush1.msra.mxu0 0.0
  %1101 = vmatprep.subr.mxu0 0.0
  %1102 = vmatpush1.msra.mxu0 0.0
  %1103 = vmatprep.subr.mxu0 0.0
  %1104 = vmatpush1.msra.mxu0 0.0
  %1105 = vmatprep.subr.mxu0 0.0
  %1106 = vmatpush1.msra.mxu0 0.0
  %1107 = vmatprep.subr.mxu0 0.0
  %1108 = vmatpush1.msra.mxu0 0.0
  %1109 = vmatprep.subr.mxu0 0.0
  %1110 = vmatpush1.msra.mxu0 0.0
  %1111 = vmatprep.subr.mxu0 0.0
  %1112 = vmatpush1.msra.mxu0 0.0
  %1113 = vmatprep.subr.mxu0 0.0
  %1114 = vmatpush1.msra.mxu0 0.0
  %1115 = vmatprep.subr.mxu0 0.0
  %1116 = vmatpush1.msra.mxu0 0.0
  %1117 = vmatprep.subr.mxu0 0.0
  %1118 = vmatpush1.msra.mxu0 0.0
  %1119 = vmatprep.subr.mxu0 0.0
  %1120 = vmatpush1.msra.mxu0 0.0
  %1121 = vmatprep.subr.mxu0 0.0
  %1122 = vmatpush1.msra.mxu0 0.0
  %1123 = vmatprep.subr.mxu0 0.0
  %1124 = vmatpush1.msra.mxu0 0.0
  %1125 = vmatprep.subr.mxu0 0.0
  %1126 = vmatpush1.msra.mxu0 0.0
  %1127 = vmatprep.subr.mxu0 0.0
  %1128 = vmatpush1.msra.mxu0 0.0
  %1129 = vmatprep.subr.mxu0 0.0
  %1130 = vmatpush1.msra.mxu0 0.0
  %1131 = vmatprep.subr.mxu0 0.0
  %1132 = vmatpush1.msra.mxu0 0.0
  %1133 = vmatprep.subr.mxu0 0.0
  %1134 = vmatpush1.msra.mxu0 0.0
  %1135 = vmatprep.subr.mxu0 0.0
  %1136 = vmatpush1.msra.mxu0 0.0
  %1137 = vmatprep.subr.mxu0 0.0
  %1138 = vmatpush1.msra.mxu0 0.0
  %1139 = vmatprep.subr.mxu0 0.0
  %1140 = vmatpush1.msra.mxu0 0.0
  %1141 = vmatprep.subr.mxu0 0.0
  %1142 = vmatpush1.msra.mxu0 0.0
  %1143 = vmatprep.subr.mxu0 0.0
  %1144 = vmatpush1.msra.mxu0 0.0
  %1145 = vmatprep.subr.mxu0 0.0
  %1146 = vmatpush1.msra.mxu0 0.0
  %1147 = vmatprep.subr.mxu0 0.0
  %1148 = vmatpush1.msra.mxu0 0.0
  %1149 = vmatprep.subr.mxu0 0.0
  %1150 = vmatpush1.msra.mxu0 0.0
  %1151 = vmatprep.subr.mxu0 0.0
  %1152 = vmatpush1.msra.mxu0 0.0
  %1153 = vmatprep.subr.mxu0 0.0
  %1154 = vmatpush1.msra.mxu0 0.0
  %1155 = vmatprep.subr.mxu0 0.0
  %1156 = vmatpush1.msra.mxu0 0.0
  %1157 = vmatprep.subr.mxu0 0.0
  %1158 = vmatpush1.msra.mxu0 0.0
  %1159 = vmatprep.mubr.f32.mxu0 0.0
  %1160 = vmatmul.mubr.f32.gmra.mrb[0].mxu0 %v1093
  %v1161 = vpop.f32.mrb[0].mxu0
  %v1162 = vadd.f32 %v1089, %v1161
  %v1163 = vpop.f32.mrb[0].mxu0
  %1164 = vdwg.mxu0
  %v1165 = vxor.u32 %v1162, 2147483648
  %v1166 = vmul.f32 %v1165, 1.442695
  %v1167 = vpow.pop %v1166
  %v1168 = vadd.f32 %v1167, 1.0
  %v1169 = vrcp.pop %v1168
  %v1170 = vmul.f32 1.0, %v1169
  %1171 = vst [vmem:[%s8] sm:$0xff] %v1170
  // Predicated region
  $region34: #{lstm_model_forward.1} parent=0 // pred_check
    _
  $region35: #{lstm_model_forward.1} parent=0 // pred_check_branch
    %1173 = sbr.rel (0) target = $region37
  $region36: #{lstm_model_forward.1} parent=0 // pred_region
    _
  $region37: #{lstm_model_forward.1} parent=0 // pred_fallthru
    _
  // Predicated region
  $region38: #{lstm_model_forward.1} parent=0 // pred_check
    _
  $region39: #{lstm_model_forward.1} parent=0 // pred_check_branch
    %1175 = sbr.rel (0) target = $region41
  $region40: #{lstm_model_forward.1} parent=0 // pred_region
    _
  $region41: #{lstm_model_forward.1} parent=0 // pred_fallthru
    _

</llo_original>
